<compile_context>
chip_gen: v6e
topology: v6e:2x2x1
jax: 0.10.0
libtpu: 0.0.40
codegen_flags: <defaults>
</compile_context>

<pallas_src>
import functools

import jax
import jax.numpy as jnp
from jax.experimental import pallas as pl
from jax.experimental.pallas import tpu as pltpu


def _round_up(a, b):
    return (a + b - 1) // b * b


def _mlp_kernel(x_ref, w1_ref, b1_ref, w2_ref, b2_ref, o_ref, acc_ref):
    # x_ref : (tm, tk)  bf16     w1_ref: (tk, H)  bf16     b1_ref: (1, H)  f32
    # w2_ref: (H, Np)   bf16     b2_ref: (1, Np)  f32
    # o_ref : (tm, Np)  out      acc_ref: (tm, H) f32 scratch
    kk = pl.program_id(1)

    @pl.when(kk == 0)
    def _():
        acc_ref[...] = jnp.zeros_like(acc_ref)

    # Partial first matmul over this K (combined_dim) tile, f32 accumulation.
    acc_ref[...] += jnp.dot(
        x_ref[...], w1_ref[...], preferred_element_type=jnp.float32
    )

    @pl.when(kk == pl.num_programs(1) - 1)
    def _():
        h = jnp.maximum(acc_ref[...] + b1_ref[...], 0.0)          # bias + ReLU (f32)
        out = jnp.dot(
            h.astype(w2_ref.dtype), w2_ref[...],
            preferred_element_type=jnp.float32,
        )
        o_ref[...] = (out + b2_ref[...]).astype(o_ref.dtype)


def _vmem_bytes(tm, tk, H, Np):
    return (
        2 * tm * tk * 2            # x tiles (bf16, double-buffered)
        + 2 * tk * H * 2           # w1 tiles (bf16, double-buffered)
        + 2 * H * Np * 2           # w2 (bf16, constant block, 2 buffers)
        + 2 * tm * Np * 4          # output tiles (f32)
        + tm * H * 4               # f32 accumulator scratch
        + 2 * (H + Np) * 4         # biases (f32)
    )


@functools.partial(jax.jit, static_argnames=("k", "tm", "tk"))
def encoder_projector_dual_concat(x, w1, b1, w2, b2, *, k, tm=256, tk=512):
    """Pallas implementation of EncoderProjectorDualConcat.forward.

    x  : (B, T, D) float32, D = encoder_dim1 + encoder_dim2
    w1 : (D*k, 2048), b1: (2048,)
    w2 : (2048, llm_dim), b2: (llm_dim,)
    returns (B, T//k, llm_dim)
    """
    B, T, D = x.shape
    num_discard = T % k
    if num_discard > 0:
        x = x[:, : T - num_discard, :]
    S = x.shape[1] // k
    K = D * k                      # combined_dim
    H = w1.shape[1]                # 2048
    N = w2.shape[1]                # llm_dim
    M = B * S
    out_dtype = x.dtype

    # ---- tile-size selection -------------------------------------------------
    # Row tile: multiple of 16 (bf16 sublane packing), no larger than needed.
    tm = _round_up(max(16, min(tm, _round_up(max(M, 1), 16))), 16)
    # Feature dims: lane-pad to multiples of 128.
    Np = _round_up(N, 128)
    Kp0 = _round_up(K, 128)
    tk = min(tk, Kp0)

    # Shrink tiles until the double-buffered footprint fits a conservative cap
    # (v7x has only 64 MiB VMEM per TensorCore).
    vmem_cap = 56 * 2**20
    while _vmem_bytes(tm, tk, H, Np) > vmem_cap and (tk > 128 or tm > 16):
        if tk > 128:
            tk = max(128, tk // 2)
        elif tm > 16:
            tm = max(16, tm // 2)
    # TODO(synk): very large llm_dim (H*Np bf16 alone > ~50 MiB) would need an
    # extra N-tiling axis / second pallas_call; typical configs fit as-is.

    Mp = _round_up(max(M, 1), tm)
    Kp = _round_up(K, tk)

    # ---- operand preparation (cast to bf16 fuses with the pad/reshape copy) --
    xm = x.reshape(M, K).astype(jnp.bfloat16)
    xm = jnp.pad(xm, ((0, Mp - M), (0, Kp - K)))
    w1p = jnp.pad(w1.astype(jnp.bfloat16), ((0, Kp - K), (0, 0)))
    w2p = jnp.pad(w2.astype(jnp.bfloat16), ((0, 0), (0, Np - N)))
    b1_2d = b1.astype(jnp.float32).reshape(1, H)
    b2_2d = jnp.pad(b2.astype(jnp.float32).reshape(1, N), ((0, 0), (0, Np - N)))

    vmem_need = _vmem_bytes(tm, tk, H, Np)
    vmem_limit = int(min(max(vmem_need * 5 // 4, 16 * 2**20), 60 * 2**20))

    grid = (Mp // tm, Kp // tk)
    out = pl.pallas_call(
        _mlp_kernel,
        out_shape=jax.ShapeDtypeStruct((Mp, Np), out_dtype),
        grid_spec=pltpu.PrefetchScalarGridSpec(
            num_scalar_prefetch=0,
            grid=grid,
            in_specs=[
                pl.BlockSpec((tm, tk), lambda i, kk: (i, kk)),
                pl.BlockSpec((tk, H), lambda i, kk: (kk, 0)),
                pl.BlockSpec((1, H), lambda i, kk: (0, 0)),
                pl.BlockSpec((H, Np), lambda i, kk: (0, 0)),
                pl.BlockSpec((1, Np), lambda i, kk: (0, 0)),
            ],
            out_specs=pl.BlockSpec((tm, Np), lambda i, kk: (i, 0)),
            scratch_shapes=[pltpu.VMEM((tm, H), jnp.float32)],
        ),
        compiler_params=pltpu.CompilerParams(
            dimension_semantics=("parallel", "arbitrary"),
            vmem_limit_bytes=vmem_limit,
        ),
    )(xm, w1p, b1_2d, w2p, b2_2d)

    # Strip row / lane padding and restore (B, S, llm_dim).
    return out[:M, :N].reshape(B, S, N)


def _reference(x, w1, b1, w2, b2, k):
    B, T, D = x.shape
    nd = T % k
    if nd > 0:
        x = x[:, : T - nd, :]
    S = x.shape[1] // k
    x = x.reshape(B, S, D * k)
    h = jnp.maximum(x @ w1 + b1, 0.0)
    return h @ w2 + b2


if __name__ == "__main__":
    # Small synthetic config (module fixes the hidden width at 2048).
    k = 4               # encoder_projector_ds_rate
    enc_dim1 = 32       # encoder_dim
    enc_dim2 = 16       # encoder2_dim
    llm_dim = 64
    hidden = 2048
    combined_dim = (enc_dim1 + enc_dim2) * k

    B, T = 2, 18        # 18 % 4 = 2 frames discarded -> 16 -> 4 stacked frames
    D = enc_dim1 + enc_dim2

    key = jax.random.PRNGKey(0)
    kx, kw1, kb1, kw2, kb2 = jax.random.split(key, 5)

    x = jax.random.normal(kx, (B, T, D), dtype=jnp.float32)
    # Deterministic synthetic parameters (nn.Linear weights stored as (in, out)).
    w1 = jax.random.normal(kw1, (combined_dim, hidden), dtype=jnp.float32) * 0.02
    b1 = jax.random.normal(kb1, (hidden,), dtype=jnp.float32) * 0.02
    w2 = jax.random.normal(kw2, (hidden, llm_dim), dtype=jnp.float32) * 0.02
    b2 = jax.random.normal(kb2, (llm_dim,), dtype=jnp.float32) * 0.02

    out = encoder_projector_dual_concat(x, w1, b1, w2, b2, k=k)
    out = jax.block_until_ready(out)

    ref = _reference(x, w1, b1, w2, b2, k)
    assert out.shape == (B, T // k, llm_dim), out.shape
    # bf16 matmul operands (f32 accumulation) -> looser tolerance than pure f32.
    err = float(jnp.max(jnp.abs(out - ref)))
    assert jnp.allclose(out, ref, atol=3e-2, rtol=3e-2), err

    print("KERNEL_OK")
</pallas_src>

<mosaic_0001>
module attributes {stable_mosaic.version = 11 : i64} {
  func.func @_mlp_kernel(%arg0: i32, %arg1: i32, %arg2: memref<16x256xbf16, #tpu.memory_space<vmem>>, %arg3: memref<256x2048xbf16, #tpu.memory_space<vmem>>, %arg4: memref<1x2048xf32, #tpu.memory_space<vmem>>, %arg5: memref<2048x128xbf16, #tpu.memory_space<vmem>>, %arg6: memref<1x128xf32, #tpu.memory_space<vmem>>, %arg7: memref<16x128xf32, #tpu.memory_space<vmem>>, %arg8: memref<16x2048xf32, #tpu.memory_space<vmem>>) attributes {dimension_semantics = [#tpu.dimension_semantics<parallel>, #tpu.dimension_semantics<arbitrary>], iteration_bounds = array<i64: 1, 1>, scalar_prefetch = 0 : i64, scratch_operands = 1 : i64, tpu.core_type = #tpu.core_type<tc>, window_params = [{transform_indices = @transform_0, window_bounds = array<i64: 16, 256>}, {transform_indices = @transform_1, window_bounds = array<i64: 256, 2048>}, {pipeline_mode = #tpu.pipeline_mode<synchronous>, transform_indices = @transform_2, window_bounds = array<i64: 1, 2048>}, {pipeline_mode = #tpu.pipeline_mode<synchronous>, transform_indices = @transform_3, window_bounds = array<i64: 2048, 128>}, {pipeline_mode = #tpu.pipeline_mode<synchronous>, transform_indices = @transform_4, window_bounds = array<i64: 1, 128>}, {transform_indices = @transform_5, window_bounds = array<i64: 16, 128>}]} {
    %c0_i32 = arith.constant 0 : i32
    %0 = arith.cmpi eq, %arg1, %c0_i32 : i32
    %1 = arith.extui %0 : i1 to i32
    %c0_i32_0 = arith.constant 0 : i32
    %2 = arith.cmpi ne, %1, %c0_i32_0 : i32
    scf.if %2 {
      %cst_10 = arith.constant 0.000000e+00 : f32
      %12 = vector.broadcast %cst_10 : f32 to vector<16x2048xf32>
      %c0_11 = arith.constant 0 : index
      %c0_12 = arith.constant 0 : index
      %13 = vector.load %arg8[%c0_11, %c0_12] : memref<16x2048xf32, #tpu.memory_space<vmem>>, vector<16x2048xf32>
      tpu.vector_store %arg8[%c0_11, %c0_12], %12 {strides = array<i32>} : memref<16x2048xf32, #tpu.memory_space<vmem>>, vector<16x2048xf32>,
    } else {
    }
    %c0 = arith.constant 0 : index
    %c0_1 = arith.constant 0 : index
    %3 = vector.load %arg8[%c0, %c0_1] : memref<16x2048xf32, #tpu.memory_space<vmem>>, vector<16x2048xf32>
    %c0_2 = arith.constant 0 : index
    %c0_3 = arith.constant 0 : index
    %4 = vector.load %arg2[%c0_2, %c0_3] : memref<16x256xbf16, #tpu.memory_space<vmem>>, vector<16x256xbf16>
    %c0_4 = arith.constant 0 : index
    %c0_5 = arith.constant 0 : index
    %5 = vector.load %arg3[%c0_4, %c0_5] : memref<256x2048xbf16, #tpu.memory_space<vmem>>, vector<256x2048xbf16>
    %cst = arith.constant dense<0.000000e+00> : vector<16x2048xf32>
    %6 = tpu.matmul %4, %5, %cst {dimension_numbers = #tpu.dot_dimension_numbers<[1], [0], [0], [1], [0, 0, 1, 1], [], []>} : vector<16x256xbf16>, vector<256x2048xbf16>, vector<16x2048xf32> -> vector<16x2048xf32>
    %7 = arith.addf %3, %6 : vector<16x2048xf32>
    %c0_6 = arith.constant 0 : index
    %c0_7 = arith.constant 0 : index
    %8 = vector.load %arg8[%c0_6, %c0_7] : memref<16x2048xf32, #tpu.memory_space<vmem>>, vector<16x2048xf32>
    tpu.vector_store %arg8[%c0_6, %c0_7], %7 {strides = array<i32>} : memref<16x2048xf32, #tpu.memory_space<vmem>>, vector<16x2048xf32>,
    %c0_i32_8 = arith.constant 0 : i32
    %9 = arith.cmpi eq, %arg1, %c0_i32_8 : i32
    %10 = arith.extui %9 : i1 to i32
    %c0_i32_9 = arith.constant 0 : i32
    %11 = arith.cmpi ne, %10, %c0_i32_9 : i32
    scf.if %11 {
      %c0_10 = arith.constant 0 : index
      %c0_11 = arith.constant 0 : index
      %12 = vector.load %arg8[%c0_10, %c0_11] : memref<16x2048xf32, #tpu.memory_space<vmem>>, vector<16x2048xf32>
      %c0_12 = arith.constant 0 : index
      %c0_13 = arith.constant 0 : index
      %13 = vector.load %arg4[%c0_12, %c0_13] : memref<1x2048xf32, #tpu.memory_space<vmem>>, vector<1x2048xf32>
      %14 = vector.broadcast %13 : vector<1x2048xf32> to vector<16x2048xf32>
      %15 = arith.addf %12, %14 : vector<16x2048xf32>
      %cst_14 = arith.constant 0.000000e+00 : f32
      %16 = vector.broadcast %cst_14 : f32 to vector<16x2048xf32>
      %17 = arith.maximumf %15, %16 : vector<16x2048xf32>
      %18 = arith.truncf %17 : vector<16x2048xf32> to vector<16x2048xbf16>
      %c0_15 = arith.constant 0 : index
      %c0_16 = arith.constant 0 : index
      %19 = vector.load %arg5[%c0_15, %c0_16] : memref<2048x128xbf16, #tpu.memory_space<vmem>>, vector<2048x128xbf16>
      %cst_17 = arith.constant dense<0.000000e+00> : vector<16x128xf32>
      %20 = tpu.matmul %18, %19, %cst_17 {dimension_numbers = #tpu.dot_dimension_numbers<[1], [0], [0], [1], [0, 0, 1, 1], [], []>} : vector<16x2048xbf16>, vector<2048x128xbf16>, vector<16x128xf32> -> vector<16x128xf32>
      %c0_18 = arith.constant 0 : index
      %c0_19 = arith.constant 0 : index
      %21 = vector.load %arg6[%c0_18, %c0_19] : memref<1x128xf32, #tpu.memory_space<vmem>>, vector<1x128xf32>
      %22 = vector.broadcast %21 : vector<1x128xf32> to vector<16x128xf32>
      %23 = arith.addf %20, %22 : vector<16x128xf32>
      %c0_20 = arith.constant 0 : index
      %c0_21 = arith.constant 0 : index
      %24 = vector.load %arg7[%c0_20, %c0_21] : memref<16x128xf32, #tpu.memory_space<vmem>>, vector<16x128xf32>
      tpu.vector_store %arg7[%c0_20, %c0_21], %23 {strides = array<i32>} : memref<16x128xf32, #tpu.memory_space<vmem>>, vector<16x128xf32>,
    } else {
    }
    return
  }
  func.func @transform_0(%arg0: i32, %arg1: i32) -> (i32, i32) {
    %c0_i32 = arith.constant 0 : i32
    return %arg0, %arg1 : i32, i32
  }
  func.func @transform_1(%arg0: i32, %arg1: i32) -> (i32, i32) {
    %c0_i32 = arith.constant 0 : i32
    %c0_i32_0 = arith.constant 0 : i32
    return %arg1, %c0_i32 : i32, i32
  }
  func.func @transform_2(%arg0: i32, %arg1: i32) -> (i32, i32) {
    %c0_i32 = arith.constant 0 : i32
    %c0_i32_0 = arith.constant 0 : i32
    %c0_i32_1 = arith.constant 0 : i32
    return %c0_i32, %c0_i32_0 : i32, i32
  }
  func.func @transform_3(%arg0: i32, %arg1: i32) -> (i32, i32) {
    %c0_i32 = arith.constant 0 : i32
    %c0_i32_0 = arith.constant 0 : i32
    %c0_i32_1 = arith.constant 0 : i32
    return %c0_i32, %c0_i32_0 : i32, i32
  }
  func.func @transform_4(%arg0: i32, %arg1: i32) -> (i32, i32) {
    %c0_i32 = arith.constant 0 : i32
    %c0_i32_0 = arith.constant 0 : i32
    %c0_i32_1 = arith.constant 0 : i32
    return %c0_i32, %c0_i32_0 : i32, i32
  }
  func.func @transform_5(%arg0: i32, %arg1: i32) -> (i32, i32) {
    %c0_i32 = arith.constant 0 : i32
    %c0_i32_0 = arith.constant 0 : i32
    return %arg0, %c0_i32 : i32, i32
  }
}

</mosaic_0001>

<llo_original>
// kernel: encoder_projector_dual_concat.1
$region0: #{encoder_projector_dual_concat.1}
  #allocation0 [shape = 'u32[]', space=smem, size = 0x4, offset = 0x4, fixed_abs, tag = 'smem constant byte address 0x4 - core index']
  #allocation1 [shape = 'u32[144,128]{1,0:T(1,128)}', space=vmem, size = 0x12000, scoped, tag = 'internal scratch']
  #allocation2 [shape = 'f32[16,2048]{1,0:T(8,128)}', space=vmem, size = 0x20000, scoped, tag = 'scratch operand']
  %s0 = inlined_call_operand.vmem [shape: bf16[16,256], index: 0, kind: input, shape index: {}]
  %s1 = inlined_call_operand.vmem [shape: bf16[256,2048], index: 1, kind: input, shape index: {}]
  %s2 = inlined_call_operand.vmem [shape: f32[1,2048], index: 2, kind: input, shape index: {}]
  %s3 = inlined_call_operand.vmem [shape: bf16[2048,128], index: 3, kind: input, shape index: {}]
  %s4 = inlined_call_operand.vmem [shape: f32[1,128], index: 4, kind: input, shape index: {}]
  %s5 = inlined_call_operand.vmem [shape: f32[16,128], index: 5, kind: output, shape index: {}]
  %s6 = sld [smem:[#allocation0]]
  $region38: #{encoder_projector_dual_concat.1} parent=0
    _
  %s8 = ssub.s32 1, %s6
  %s9 = scalar_select 0, %s8, %s6
  // Predicated region
  $region2: #{encoder_projector_dual_concat.1} parent=0 // pred_check
    _
  $region3: #{encoder_projector_dual_concat.1} parent=0 // pred_check_branch
    %11 = sbr.rel (0) target = $region5
  $region4: #{encoder_projector_dual_concat.1} parent=0 // pred_region
    _
  $region5: #{encoder_projector_dual_concat.1} parent=0 // pred_fallthru
    _
  // Predicated region
  $region6: #{encoder_projector_dual_concat.1} parent=0 // pred_check
    _
  $region7: #{encoder_projector_dual_concat.1} parent=0 // pred_check_branch
    %13 = sbr.rel (0) target = $region9
  $region8: #{encoder_projector_dual_concat.1} parent=0 // pred_region
    _
  $region9: #{encoder_projector_dual_concat.1} parent=0 // pred_fallthru
    _
  // Predicated region
  $region10: #{encoder_projector_dual_concat.1} parent=0 // pred_check
    _
  $region11: #{encoder_projector_dual_concat.1} parent=0 // pred_check_branch
    %15 = sbr.rel (0) target = $region13
  $region12: #{encoder_projector_dual_concat.1} parent=0 // pred_region
    _
  $region13: #{encoder_projector_dual_concat.1} parent=0 // pred_fallthru
    _
  // Predicated region
  $region14: #{encoder_projector_dual_concat.1} parent=0 // pred_check
    _
  $region15: #{encoder_projector_dual_concat.1} parent=0 // pred_check_branch
    %17 = sbr.rel (0) target = $region17
  $region16: #{encoder_projector_dual_concat.1} parent=0 // pred_region
    _
  $region17: #{encoder_projector_dual_concat.1} parent=0 // pred_fallthru
    _
  // Predicated region
  $region18: #{encoder_projector_dual_concat.1} parent=0 // pred_check
    _
  $region19: #{encoder_projector_dual_concat.1} parent=0 // pred_check_branch
    %19 = sbr.rel (0) target = $region21
  $region20: #{encoder_projector_dual_concat.1} parent=0 // pred_region
    _
  $region21: #{encoder_projector_dual_concat.1} parent=0 // pred_fallthru
    _
  %p21 = scmp.eq.s32.totalorder 0, 0
  // Predicated region
  $region22: #{encoder_projector_dual_concat.1} parent=0 // pred_check
    %p22 = pneg %p21
  $region23: #{encoder_projector_dual_concat.1} parent=0 // pred_check_branch
    %24 = sbr.rel (%p22) target = $region25
  $region24: #{encoder_projector_dual_concat.1} parent=0 // pred_region
    %25 = vst [vmem:[#allocation2] sm:$0xff] 0.0
    %26 = vst [vmem:[#allocation2 + $0x8] sm:$0xff] 0.0
    %27 = vst [vmem:[#allocation2 + $0x10] sm:$0xff] 0.0
    %28 = vst [vmem:[#allocation2 + $0x18] sm:$0xff] 0.0
    %29 = vst [vmem:[#allocation2 + $0x20] sm:$0xff] 0.0
    %30 = vst [vmem:[#allocation2 + $0x28] sm:$0xff] 0.0
    %31 = vst [vmem:[#allocation2 + $0x30] sm:$0xff] 0.0
    %32 = vst [vmem:[#allocation2 + $0x38] sm:$0xff] 0.0
    %33 = vst [vmem:[#allocation2 + $0x40] sm:$0xff] 0.0
    %34 = vst [vmem:[#allocation2 + $0x48] sm:$0xff] 0.0
    %35 = vst [vmem:[#allocation2 + $0x50] sm:$0xff] 0.0
    %36 = vst [vmem:[#allocation2 + $0x58] sm:$0xff] 0.0
    %37 = vst [vmem:[#allocation2 + $0x60] sm:$0xff] 0.0
    %38 = vst [vmem:[#allocation2 + $0x68] sm:$0xff] 0.0
    %39 = vst [vmem:[#allocation2 + $0x70] sm:$0xff] 0.0
    %40 = vst [vmem:[#allocation2 + $0x78] sm:$0xff] 0.0
    %41 = vst [vmem:[#allocation2 + $0x80] sm:$0xff] 0.0
    %42 = vst [vmem:[#allocation2 + $0x88] sm:$0xff] 0.0
    %43 = vst [vmem:[#allocation2 + $0x90] sm:$0xff] 0.0
    %44 = vst [vmem:[#allocation2 + $0x98] sm:$0xff] 0.0
    %45 = vst [vmem:[#allocation2 + $0xa0] sm:$0xff] 0.0
    %46 = vst [vmem:[#allocation2 + $0xa8] sm:$0xff] 0.0
    %47 = vst [vmem:[#allocation2 + $0xb0] sm:$0xff] 0.0
    %48 = vst [vmem:[#allocation2 + $0xb8] sm:$0xff] 0.0
    %49 = vst [vmem:[#allocation2 + $0xc0] sm:$0xff] 0.0
    %50 = vst [vmem:[#allocation2 + $0xc8] sm:$0xff] 0.0
    %51 = vst [vmem:[#allocation2 + $0xd0] sm:$0xff] 0.0
    %52 = vst [vmem:[#allocation2 + $0xd8] sm:$0xff] 0.0
    %53 = vst [vmem:[#allocation2 + $0xe0] sm:$0xff] 0.0
    %54 = vst [vmem:[#allocation2 + $0xe8] sm:$0xff] 0.0
    %55 = vst [vmem:[#allocation2 + $0xf0] sm:$0xff] 0.0
    %56 = vst [vmem:[#allocation2 + $0xf8] sm:$0xff] 0.0
  $region25: #{encoder_projector_dual_concat.1} parent=0 // pred_fallthru
    _
  %v57 = vld [vmem:[#allocation2] sm:$0xff]
  %v58 = vld [vmem:[#allocation2 + $0x8] sm:$0xff]
  %v59 = vld [vmem:[#allocation2 + $0x10] sm:$0xff]
  %v60 = vld [vmem:[#allocation2 + $0x18] sm:$0xff]
  %v61 = vld [vmem:[#allocation2 + $0x20] sm:$0xff]
  %v62 = vld [vmem:[#allocation2 + $0x28] sm:$0xff]
  %v63 = vld [vmem:[#allocation2 + $0x30] sm:$0xff]
  %v64 = vld [vmem:[#allocation2 + $0x38] sm:$0xff]
  %v65 = vld [vmem:[#allocation2 + $0x40] sm:$0xff]
  %v66 = vld [vmem:[#allocation2 + $0x48] sm:$0xff]
  %v67 = vld [vmem:[#allocation2 + $0x50] sm:$0xff]
  %v68 = vld [vmem:[#allocation2 + $0x58] sm:$0xff]
  %v69 = vld [vmem:[#allocation2 + $0x60] sm:$0xff]
  %v70 = vld [vmem:[#allocation2 + $0x68] sm:$0xff]
  %v71 = vld [vmem:[#allocation2 + $0x70] sm:$0xff]
  %v72 = vld [vmem:[#allocation2 + $0x78] sm:$0xff]
  %v73 = vld [vmem:[#allocation2 + $0x80] sm:$0xff]
  %v74 = vld [vmem:[#allocation2 + $0x88] sm:$0xff]
  %v75 = vld [vmem:[#allocation2 + $0x90] sm:$0xff]
  %v76 = vld [vmem:[#allocation2 + $0x98] sm:$0xff]
  %v77 = vld [vmem:[#allocation2 + $0xa0] sm:$0xff]
  %v78 = vld [vmem:[#allocation2 + $0xa8] sm:$0xff]
  %v79 = vld [vmem:[#allocation2 + $0xb0] sm:$0xff]
  %v80 = vld [vmem:[#allocation2 + $0xb8] sm:$0xff]
  %v81 = vld [vmem:[#allocation2 + $0xc0] sm:$0xff]
  %v82 = vld [vmem:[#allocation2 + $0xc8] sm:$0xff]
  %v83 = vld [vmem:[#allocation2 + $0xd0] sm:$0xff]
  %v84 = vld [vmem:[#allocation2 + $0xd8] sm:$0xff]
  %v85 = vld [vmem:[#allocation2 + $0xe0] sm:$0xff]
  %v86 = vld [vmem:[#allocation2 + $0xe8] sm:$0xff]
  %v87 = vld [vmem:[#allocation2 + $0xf0] sm:$0xff]
  %v88 = vld [vmem:[#allocation2 + $0xf8] sm:$0xff]
  %v89 = vld [vmem:[%s0] sm:$0xff]
  %v90 = vld [vmem:[%s0 + $0x8] sm:$0xff]
  %v91 = vld [vmem:[%s1] sm:$0xff]
  %v92 = vld [vmem:[%s1 + $0x8] sm:$0xff]
  %v93 = vld [vmem:[%s1 + $0x10] sm:$0xff]
  %v94 = vld [vmem:[%s1 + $0x18] sm:$0xff]
  %v95 = vld [vmem:[%s1 + $0x20] sm:$0xff]
  %v96 = vld [vmem:[%s1 + $0x28] sm:$0xff]
  %v97 = vld [vmem:[%s1 + $0x30] sm:$0xff]
  %v98 = vld [vmem:[%s1 + $0x38] sm:$0xff]
  %v99 = vld [vmem:[%s1 + $0x40] sm:$0xff]
  %v100 = vld [vmem:[%s1 + $0x48] sm:$0xff]
  %v101 = vld [vmem:[%s1 + $0x50] sm:$0xff]
  %v102 = vld [vmem:[%s1 + $0x58] sm:$0xff]
  %v103 = vld [vmem:[%s1 + $0x60] sm:$0xff]
  %v104 = vld [vmem:[%s1 + $0x68] sm:$0xff]
  %v105 = vld [vmem:[%s1 + $0x70] sm:$0xff]
  %v106 = vld [vmem:[%s1 + $0x78] sm:$0xff]
  %v107 = vld [vmem:[%s1 + $0x80] sm:$0xff]
  %v108 = vld [vmem:[%s1 + $0x88] sm:$0xff]
  %v109 = vld [vmem:[%s1 + $0x90] sm:$0xff]
  %v110 = vld [vmem:[%s1 + $0x98] sm:$0xff]
  %v111 = vld [vmem:[%s1 + $0xa0] sm:$0xff]
  %v112 = vld [vmem:[%s1 + $0xa8] sm:$0xff]
  %v113 = vld [vmem:[%s1 + $0xb0] sm:$0xff]
  %v114 = vld [vmem:[%s1 + $0xb8] sm:$0xff]
  %v115 = vld [vmem:[%s1 + $0xc0] sm:$0xff]
  %v116 = vld [vmem:[%s1 + $0xc8] sm:$0xff]
  %v117 = vld [vmem:[%s1 + $0xd0] sm:$0xff]
  %v118 = vld [vmem:[%s1 + $0xd8] sm:$0xff]
  %v119 = vld [vmem:[%s1 + $0xe0] sm:$0xff]
  %v120 = vld [vmem:[%s1 + $0xe8] sm:$0xff]
  %v121 = vld [vmem:[%s1 + $0xf0] sm:$0xff]
  %v122 = vld [vmem:[%s1 + $0xf8] sm:$0xff]
  %v123 = vld [vmem:[%s1 + $0x100] sm:$0xff]
  %v124 = vld [vmem:[%s1 + $0x108] sm:$0xff]
  %v125 = vld [vmem:[%s1 + $0x110] sm:$0xff]
  %v126 = vld [vmem:[%s1 + $0x118] sm:$0xff]
  %v127 = vld [vmem:[%s1 + $0x120] sm:$0xff]
  %v128 = vld [vmem:[%s1 + $0x128] sm:$0xff]
  %v129 = vld [vmem:[%s1 + $0x130] sm:$0xff]
  %v130 = vld [vmem:[%s1 + $0x138] sm:$0xff]
  %v131 = vld [vmem:[%s1 + $0x140] sm:$0xff]
  %v132 = vld [vmem:[%s1 + $0x148] sm:$0xff]
  %v133 = vld [vmem:[%s1 + $0x150] sm:$0xff]
  %v134 = vld [vmem:[%s1 + $0x158] sm:$0xff]
  %v135 = vld [vmem:[%s1 + $0x160] sm:$0xff]
  %v136 = vld [vmem:[%s1 + $0x168] sm:$0xff]
  %v137 = vld [vmem:[%s1 + $0x170] sm:$0xff]
  %v138 = vld [vmem:[%s1 + $0x178] sm:$0xff]
  %v139 = vld [vmem:[%s1 + $0x180] sm:$0xff]
  %v140 = vld [vmem:[%s1 + $0x188] sm:$0xff]
  %v141 = vld [vmem:[%s1 + $0x190] sm:$0xff]
  %v142 = vld [vmem:[%s1 + $0x198] sm:$0xff]
  %v143 = vld [vmem:[%s1 + $0x1a0] sm:$0xff]
  %v144 = vld [vmem:[%s1 + $0x1a8] sm:$0xff]
  %v145 = vld [vmem:[%s1 + $0x1b0] sm:$0xff]
  %v146 = vld [vmem:[%s1 + $0x1b8] sm:$0xff]
  %v147 = vld [vmem:[%s1 + $0x1c0] sm:$0xff]
  %v148 = vld [vmem:[%s1 + $0x1c8] sm:$0xff]
  %v149 = vld [vmem:[%s1 + $0x1d0] sm:$0xff]
  %v150 = vld [vmem:[%s1 + $0x1d8] sm:$0xff]
  %v151 = vld [vmem:[%s1 + $0x1e0] sm:$0xff]
  %v152 = vld [vmem:[%s1 + $0x1e8] sm:$0xff]
  %v153 = vld [vmem:[%s1 + $0x1f0] sm:$0xff]
  %v154 = vld [vmem:[%s1 + $0x1f8] sm:$0xff]
  %v155 = vld [vmem:[%s1 + $0x200] sm:$0xff]
  %v156 = vld [vmem:[%s1 + $0x208] sm:$0xff]
  %v157 = vld [vmem:[%s1 + $0x210] sm:$0xff]
  %v158 = vld [vmem:[%s1 + $0x218] sm:$0xff]
  %v159 = vld [vmem:[%s1 + $0x220] sm:$0xff]
  %v160 = vld [vmem:[%s1 + $0x228] sm:$0xff]
  %v161 = vld [vmem:[%s1 + $0x230] sm:$0xff]
  %v162 = vld [vmem:[%s1 + $0x238] sm:$0xff]
  %v163 = vld [vmem:[%s1 + $0x240] sm:$0xff]
  %v164 = vld [vmem:[%s1 + $0x248] sm:$0xff]
  %v165 = vld [vmem:[%s1 + $0x250] sm:$0xff]
  %v166 = vld [vmem:[%s1 + $0x258] sm:$0xff]
  %v167 = vld [vmem:[%s1 + $0x260] sm:$0xff]
  %v168 = vld [vmem:[%s1 + $0x268] sm:$0xff]
  %v169 = vld [vmem:[%s1 + $0x270] sm:$0xff]
  %v170 = vld [vmem:[%s1 + $0x278] sm:$0xff]
  %v171 = vld [vmem:[%s1 + $0x280] sm:$0xff]
  %v172 = vld [vmem:[%s1 + $0x288] sm:$0xff]
  %v173 = vld [vmem:[%s1 + $0x290] sm:$0xff]
  %v174 = vld [vmem:[%s1 + $0x298] sm:$0xff]
  %v175 = vld [vmem:[%s1 + $0x2a0] sm:$0xff]
  %v176 = vld [vmem:[%s1 + $0x2a8] sm:$0xff]
  %v177 = vld [vmem:[%s1 + $0x2b0] sm:$0xff]
  %v178 = vld [vmem:[%s1 + $0x2b8] sm:$0xff]
  %v179 = vld [vmem:[%s1 + $0x2c0] sm:$0xff]
  %v180 = vld [vmem:[%s1 + $0x2c8] sm:$0xff]
  %v181 = vld [vmem:[%s1 + $0x2d0] sm:$0xff]
  %v182 = vld [vmem:[%s1 + $0x2d8] sm:$0xff]
  %v183 = vld [vmem:[%s1 + $0x2e0] sm:$0xff]
  %v184 = vld [vmem:[%s1 + $0x2e8] sm:$0xff]
  %v185 = vld [vmem:[%s1 + $0x2f0] sm:$0xff]
  %v186 = vld [vmem:[%s1 + $0x2f8] sm:$0xff]
  %v187 = vld [vmem:[%s1 + $0x300] sm:$0xff]
  %v188 = vld [vmem:[%s1 + $0x308] sm:$0xff]
  %v189 = vld [vmem:[%s1 + $0x310] sm:$0xff]
  %v190 = vld [vmem:[%s1 + $0x318] sm:$0xff]
  %v191 = vld [vmem:[%s1 + $0x320] sm:$0xff]
  %v192 = vld [vmem:[%s1 + $0x328] sm:$0xff]
  %v193 = vld [vmem:[%s1 + $0x330] sm:$0xff]
  %v194 = vld [vmem:[%s1 + $0x338] sm:$0xff]
  %v195 = vld [vmem:[%s1 + $0x340] sm:$0xff]
  %v196 = vld [vmem:[%s1 + $0x348] sm:$0xff]
  %v197 = vld [vmem:[%s1 + $0x350] sm:$0xff]
  %v198 = vld [vmem:[%s1 + $0x358] sm:$0xff]
  %v199 = vld [vmem:[%s1 + $0x360] sm:$0xff]
  %v200 = vld [vmem:[%s1 + $0x368] sm:$0xff]
  %v201 = vld [vmem:[%s1 + $0x370] sm:$0xff]
  %v202 = vld [vmem:[%s1 + $0x378] sm:$0xff]
  %v203 = vld [vmem:[%s1 + $0x380] sm:$0xff]
  %v204 = vld [vmem:[%s1 + $0x388] sm:$0xff]
  %v205 = vld [vmem:[%s1 + $0x390] sm:$0xff]
  %v206 = vld [vmem:[%s1 + $0x398] sm:$0xff]
  %v207 = vld [vmem:[%s1 + $0x3a0] sm:$0xff]
  %v208 = vld [vmem:[%s1 + $0x3a8] sm:$0xff]
  %v209 = vld [vmem:[%s1 + $0x3b0] sm:$0xff]
  %v210 = vld [vmem:[%s1 + $0x3b8] sm:$0xff]
  %v211 = vld [vmem:[%s1 + $0x3c0] sm:$0xff]
  %v212 = vld [vmem:[%s1 + $0x3c8] sm:$0xff]
  %v213 = vld [vmem:[%s1 + $0x3d0] sm:$0xff]
  %v214 = vld [vmem:[%s1 + $0x3d8] sm:$0xff]
  %v215 = vld [vmem:[%s1 + $0x3e0] sm:$0xff]
  %v216 = vld [vmem:[%s1 + $0x3e8] sm:$0xff]
  %v217 = vld [vmem:[%s1 + $0x3f0] sm:$0xff]
  %v218 = vld [vmem:[%s1 + $0x3f8] sm:$0xff]
  %v219 = vld [vmem:[%s1 + $0x400] sm:$0xff]
  %v220 = vld [vmem:[%s1 + $0x408] sm:$0xff]
  %v221 = vld [vmem:[%s1 + $0x410] sm:$0xff]
  %v222 = vld [vmem:[%s1 + $0x418] sm:$0xff]
  %v223 = vld [vmem:[%s1 + $0x420] sm:$0xff]
  %v224 = vld [vmem:[%s1 + $0x428] sm:$0xff]
  %v225 = vld [vmem:[%s1 + $0x430] sm:$0xff]
  %v226 = vld [vmem:[%s1 + $0x438] sm:$0xff]
  %v227 = vld [vmem:[%s1 + $0x440] sm:$0xff]
  %v228 = vld [vmem:[%s1 + $0x448] sm:$0xff]
  %v229 = vld [vmem:[%s1 + $0x450] sm:$0xff]
  %v230 = vld [vmem:[%s1 + $0x458] sm:$0xff]
  %v231 = vld [vmem:[%s1 + $0x460] sm:$0xff]
  %v232 = vld [vmem:[%s1 + $0x468] sm:$0xff]
  %v233 = vld [vmem:[%s1 + $0x470] sm:$0xff]
  %v234 = vld [vmem:[%s1 + $0x478] sm:$0xff]
  %v235 = vld [vmem:[%s1 + $0x480] sm:$0xff]
  %v236 = vld [vmem:[%s1 + $0x488] sm:$0xff]
  %v237 = vld [vmem:[%s1 + $0x490] sm:$0xff]
  %v238 = vld [vmem:[%s1 + $0x498] sm:$0xff]
  %v239 = vld [vmem:[%s1 + $0x4a0] sm:$0xff]
  %v240 = vld [vmem:[%s1 + $0x4a8] sm:$0xff]
  %v241 = vld [vmem:[%s1 + $0x4b0] sm:$0xff]
  %v242 = vld [vmem:[%s1 + $0x4b8] sm:$0xff]
  %v243 = vld [vmem:[%s1 + $0x4c0] sm:$0xff]
  %v244 = vld [vmem:[%s1 + $0x4c8] sm:$0xff]
  %v245 = vld [vmem:[%s1 + $0x4d0] sm:$0xff]
  %v246 = vld [vmem:[%s1 + $0x4d8] sm:$0xff]
  %v247 = vld [vmem:[%s1 + $0x4e0] sm:$0xff]
  %v248 = vld [vmem:[%s1 + $0x4e8] sm:$0xff]
  %v249 = vld [vmem:[%s1 + $0x4f0] sm:$0xff]
  %v250 = vld [vmem:[%s1 + $0x4f8] sm:$0xff]
  %v251 = vld [vmem:[%s1 + $0x500] sm:$0xff]
  %v252 = vld [vmem:[%s1 + $0x508] sm:$0xff]
  %v253 = vld [vmem:[%s1 + $0x510] sm:$0xff]
  %v254 = vld [vmem:[%s1 + $0x518] sm:$0xff]
  %v255 = vld [vmem:[%s1 + $0x520] sm:$0xff]
  %v256 = vld [vmem:[%s1 + $0x528] sm:$0xff]
  %v257 = vld [vmem:[%s1 + $0x530] sm:$0xff]
  %v258 = vld [vmem:[%s1 + $0x538] sm:$0xff]
  %v259 = vld [vmem:[%s1 + $0x540] sm:$0xff]
  %v260 = vld [vmem:[%s1 + $0x548] sm:$0xff]
  %v261 = vld [vmem:[%s1 + $0x550] sm:$0xff]
  %v262 = vld [vmem:[%s1 + $0x558] sm:$0xff]
  %v263 = vld [vmem:[%s1 + $0x560] sm:$0xff]
  %v264 = vld [vmem:[%s1 + $0x568] sm:$0xff]
  %v265 = vld [vmem:[%s1 + $0x570] sm:$0xff]
  %v266 = vld [vmem:[%s1 + $0x578] sm:$0xff]
  %v267 = vld [vmem:[%s1 + $0x580] sm:$0xff]
  %v268 = vld [vmem:[%s1 + $0x588] sm:$0xff]
  %v269 = vld [vmem:[%s1 + $0x590] sm:$0xff]
  %v270 = vld [vmem:[%s1 + $0x598] sm:$0xff]
  %v271 = vld [vmem:[%s1 + $0x5a0] sm:$0xff]
  %v272 = vld [vmem:[%s1 + $0x5a8] sm:$0xff]
  %v273 = vld [vmem:[%s1 + $0x5b0] sm:$0xff]
  %v274 = vld [vmem:[%s1 + $0x5b8] sm:$0xff]
  %v275 = vld [vmem:[%s1 + $0x5c0] sm:$0xff]
  %v276 = vld [vmem:[%s1 + $0x5c8] sm:$0xff]
  %v277 = vld [vmem:[%s1 + $0x5d0] sm:$0xff]
  %v278 = vld [vmem:[%s1 + $0x5d8] sm:$0xff]
  %v279 = vld [vmem:[%s1 + $0x5e0] sm:$0xff]
  %v280 = vld [vmem:[%s1 + $0x5e8] sm:$0xff]
  %v281 = vld [vmem:[%s1 + $0x5f0] sm:$0xff]
  %v282 = vld [vmem:[%s1 + $0x5f8] sm:$0xff]
  %v283 = vld [vmem:[%s1 + $0x600] sm:$0xff]
  %v284 = vld [vmem:[%s1 + $0x608] sm:$0xff]
  %v285 = vld [vmem:[%s1 + $0x610] sm:$0xff]
  %v286 = vld [vmem:[%s1 + $0x618] sm:$0xff]
  %v287 = vld [vmem:[%s1 + $0x620] sm:$0xff]
  %v288 = vld [vmem:[%s1 + $0x628] sm:$0xff]
  %v289 = vld [vmem:[%s1 + $0x630] sm:$0xff]
  %v290 = vld [vmem:[%s1 + $0x638] sm:$0xff]
  %v291 = vld [vmem:[%s1 + $0x640] sm:$0xff]
  %v292 = vld [vmem:[%s1 + $0x648] sm:$0xff]
  %v293 = vld [vmem:[%s1 + $0x650] sm:$0xff]
  %v294 = vld [vmem:[%s1 + $0x658] sm:$0xff]
  %v295 = vld [vmem:[%s1 + $0x660] sm:$0xff]
  %v296 = vld [vmem:[%s1 + $0x668] sm:$0xff]
  %v297 = vld [vmem:[%s1 + $0x670] sm:$0xff]
  %v298 = vld [vmem:[%s1 + $0x678] sm:$0xff]
  %v299 = vld [vmem:[%s1 + $0x680] sm:$0xff]
  %v300 = vld [vmem:[%s1 + $0x688] sm:$0xff]
  %v301 = vld [vmem:[%s1 + $0x690] sm:$0xff]
  %v302 = vld [vmem:[%s1 + $0x698] sm:$0xff]
  %v303 = vld [vmem:[%s1 + $0x6a0] sm:$0xff]
  %v304 = vld [vmem:[%s1 + $0x6a8] sm:$0xff]
  %v305 = vld [vmem:[%s1 + $0x6b0] sm:$0xff]
  %v306 = vld [vmem:[%s1 + $0x6b8] sm:$0xff]
  %v307 = vld [vmem:[%s1 + $0x6c0] sm:$0xff]
  %v308 = vld [vmem:[%s1 + $0x6c8] sm:$0xff]
  %v309 = vld [vmem:[%s1 + $0x6d0] sm:$0xff]
  %v310 = vld [vmem:[%s1 + $0x6d8] sm:$0xff]
  %v311 = vld [vmem:[%s1 + $0x6e0] sm:$0xff]
  %v312 = vld [vmem:[%s1 + $0x6e8] sm:$0xff]
  %v313 = vld [vmem:[%s1 + $0x6f0] sm:$0xff]
  %v314 = vld [vmem:[%s1 + $0x6f8] sm:$0xff]
  %v315 = vld [vmem:[%s1 + $0x700] sm:$0xff]
  %v316 = vld [vmem:[%s1 + $0x708] sm:$0xff]
  %v317 = vld [vmem:[%s1 + $0x710] sm:$0xff]
  %v318 = vld [vmem:[%s1 + $0x718] sm:$0xff]
  %v319 = vld [vmem:[%s1 + $0x720] sm:$0xff]
  %v320 = vld [vmem:[%s1 + $0x728] sm:$0xff]
  %v321 = vld [vmem:[%s1 + $0x730] sm:$0xff]
  %v322 = vld [vmem:[%s1 + $0x738] sm:$0xff]
  %v323 = vld [vmem:[%s1 + $0x740] sm:$0xff]
  %v324 = vld [vmem:[%s1 + $0x748] sm:$0xff]
  %v325 = vld [vmem:[%s1 + $0x750] sm:$0xff]
  %v326 = vld [vmem:[%s1 + $0x758] sm:$0xff]
  %v327 = vld [vmem:[%s1 + $0x760] sm:$0xff]
  %v328 = vld [vmem:[%s1 + $0x768] sm:$0xff]
  %v329 = vld [vmem:[%s1 + $0x770] sm:$0xff]
  %v330 = vld [vmem:[%s1 + $0x778] sm:$0xff]
  %v331 = vld [vmem:[%s1 + $0x780] sm:$0xff]
  %v332 = vld [vmem:[%s1 + $0x788] sm:$0xff]
  %v333 = vld [vmem:[%s1 + $0x790] sm:$0xff]
  %v334 = vld [vmem:[%s1 + $0x798] sm:$0xff]
  %v335 = vld [vmem:[%s1 + $0x7a0] sm:$0xff]
  %v336 = vld [vmem:[%s1 + $0x7a8] sm:$0xff]
  %v337 = vld [vmem:[%s1 + $0x7b0] sm:$0xff]
  %v338 = vld [vmem:[%s1 + $0x7b8] sm:$0xff]
  %v339 = vld [vmem:[%s1 + $0x7c0] sm:$0xff]
  %v340 = vld [vmem:[%s1 + $0x7c8] sm:$0xff]
  %v341 = vld [vmem:[%s1 + $0x7d0] sm:$0xff]
  %v342 = vld [vmem:[%s1 + $0x7d8] sm:$0xff]
  %v343 = vld [vmem:[%s1 + $0x7e0] sm:$0xff]
  %v344 = vld [vmem:[%s1 + $0x7e8] sm:$0xff]
  %v345 = vld [vmem:[%s1 + $0x7f0] sm:$0xff]
  %v346 = vld [vmem:[%s1 + $0x7f8] sm:$0xff]
  %v349 = vunpack.c.l.b16 %v89
  %v350 = vunpack.c.h.b16 %v89
  %v351 = vunpack.c.l.b16 %v90
  %v352 = vunpack.c.h.b16 %v90
  %v353 = vpack.c.b16 %v351, %v349
  %v354 = vpack.c.b16 %v352, %v350
  %v613 = vunpack.c.l.b16 %v91
  %v614 = vunpack.c.h.b16 %v91
  %v615 = vunpack.c.l.b16 %v92
  %v616 = vunpack.c.h.b16 %v92
  %v617 = vunpack.c.l.b16 %v93
  %v618 = vunpack.c.h.b16 %v93
  %v619 = vunpack.c.l.b16 %v94
  %v620 = vunpack.c.h.b16 %v94
  %v621 = vunpack.c.l.b16 %v95
  %v622 = vunpack.c.h.b16 %v95
  %v623 = vunpack.c.l.b16 %v96
  %v624 = vunpack.c.h.b16 %v96
  %v625 = vunpack.c.l.b16 %v97
  %v626 = vunpack.c.h.b16 %v97
  %v627 = vunpack.c.l.b16 %v98
  %v628 = vunpack.c.h.b16 %v98
  %v629 = vunpack.c.l.b16 %v99
  %v630 = vunpack.c.h.b16 %v99
  %v631 = vunpack.c.l.b16 %v100
  %v632 = vunpack.c.h.b16 %v100
  %v633 = vunpack.c.l.b16 %v101
  %v634 = vunpack.c.h.b16 %v101
  %v635 = vunpack.c.l.b16 %v102
  %v636 = vunpack.c.h.b16 %v102
  %v637 = vunpack.c.l.b16 %v103
  %v638 = vunpack.c.h.b16 %v103
  %v639 = vunpack.c.l.b16 %v104
  %v640 = vunpack.c.h.b16 %v104
  %v641 = vunpack.c.l.b16 %v105
  %v642 = vunpack.c.h.b16 %v105
  %v643 = vunpack.c.l.b16 %v106
  %v644 = vunpack.c.h.b16 %v106
  %v645 = vunpack.c.l.b16 %v107
  %v646 = vunpack.c.h.b16 %v107
  %v647 = vunpack.c.l.b16 %v108
  %v648 = vunpack.c.h.b16 %v108
  %v649 = vunpack.c.l.b16 %v109
  %v650 = vunpack.c.h.b16 %v109
  %v651 = vunpack.c.l.b16 %v110
  %v652 = vunpack.c.h.b16 %v110
  %v653 = vunpack.c.l.b16 %v111
  %v654 = vunpack.c.h.b16 %v111
  %v655 = vunpack.c.l.b16 %v112
  %v656 = vunpack.c.h.b16 %v112
  %v657 = vunpack.c.l.b16 %v113
  %v658 = vunpack.c.h.b16 %v113
  %v659 = vunpack.c.l.b16 %v114
  %v660 = vunpack.c.h.b16 %v114
  %v661 = vunpack.c.l.b16 %v115
  %v662 = vunpack.c.h.b16 %v115
  %v663 = vunpack.c.l.b16 %v116
  %v664 = vunpack.c.h.b16 %v116
  %v665 = vunpack.c.l.b16 %v117
  %v666 = vunpack.c.h.b16 %v117
  %v667 = vunpack.c.l.b16 %v118
  %v668 = vunpack.c.h.b16 %v118
  %v669 = vunpack.c.l.b16 %v119
  %v670 = vunpack.c.h.b16 %v119
  %v671 = vunpack.c.l.b16 %v120
  %v672 = vunpack.c.h.b16 %v120
  %v673 = vunpack.c.l.b16 %v121
  %v674 = vunpack.c.h.b16 %v121
  %v675 = vunpack.c.l.b16 %v122
  %v676 = vunpack.c.h.b16 %v122
  %v677 = vunpack.c.l.b16 %v123
  %v678 = vunpack.c.h.b16 %v123
  %v679 = vunpack.c.l.b16 %v124
  %v680 = vunpack.c.h.b16 %v124
  %v681 = vunpack.c.l.b16 %v125
  %v682 = vunpack.c.h.b16 %v125
  %v683 = vunpack.c.l.b16 %v126
  %v684 = vunpack.c.h.b16 %v126
  %v685 = vunpack.c.l.b16 %v127
  %v686 = vunpack.c.h.b16 %v127
  %v687 = vunpack.c.l.b16 %v128
  %v688 = vunpack.c.h.b16 %v128
  %v689 = vunpack.c.l.b16 %v129
  %v690 = vunpack.c.h.b16 %v129
  %v691 = vunpack.c.l.b16 %v130
  %v692 = vunpack.c.h.b16 %v130
  %v693 = vunpack.c.l.b16 %v131
  %v694 = vunpack.c.h.b16 %v131
  %v695 = vunpack.c.l.b16 %v132
  %v696 = vunpack.c.h.b16 %v132
  %v697 = vunpack.c.l.b16 %v133
  %v698 = vunpack.c.h.b16 %v133
  %v699 = vunpack.c.l.b16 %v134
  %v700 = vunpack.c.h.b16 %v134
  %v701 = vunpack.c.l.b16 %v135
  %v702 = vunpack.c.h.b16 %v135
  %v703 = vunpack.c.l.b16 %v136
  %v704 = vunpack.c.h.b16 %v136
  %v705 = vunpack.c.l.b16 %v137
  %v706 = vunpack.c.h.b16 %v137
  %v707 = vunpack.c.l.b16 %v138
  %v708 = vunpack.c.h.b16 %v138
  %v709 = vunpack.c.l.b16 %v139
  %v710 = vunpack.c.h.b16 %v139
  %v711 = vunpack.c.l.b16 %v140
  %v712 = vunpack.c.h.b16 %v140
  %v713 = vunpack.c.l.b16 %v141
  %v714 = vunpack.c.h.b16 %v141
  %v715 = vunpack.c.l.b16 %v142
  %v716 = vunpack.c.h.b16 %v142
  %v717 = vunpack.c.l.b16 %v143
  %v718 = vunpack.c.h.b16 %v143
  %v719 = vunpack.c.l.b16 %v144
  %v720 = vunpack.c.h.b16 %v144
  %v721 = vunpack.c.l.b16 %v145
  %v722 = vunpack.c.h.b16 %v145
  %v723 = vunpack.c.l.b16 %v146
  %v724 = vunpack.c.h.b16 %v146
  %v725 = vunpack.c.l.b16 %v147
  %v726 = vunpack.c.h.b16 %v147
  %v727 = vunpack.c.l.b16 %v148
  %v728 = vunpack.c.h.b16 %v148
  %v729 = vunpack.c.l.b16 %v149
  %v730 = vunpack.c.h.b16 %v149
  %v731 = vunpack.c.l.b16 %v150
  %v732 = vunpack.c.h.b16 %v150
  %v733 = vunpack.c.l.b16 %v151
  %v734 = vunpack.c.h.b16 %v151
  %v735 = vunpack.c.l.b16 %v152
  %v736 = vunpack.c.h.b16 %v152
  %v737 = vunpack.c.l.b16 %v153
  %v738 = vunpack.c.h.b16 %v153
  %v739 = vunpack.c.l.b16 %v154
  %v740 = vunpack.c.h.b16 %v154
  %v741 = vunpack.c.l.b16 %v155
  %v742 = vunpack.c.h.b16 %v155
  %v743 = vunpack.c.l.b16 %v156
  %v744 = vunpack.c.h.b16 %v156
  %v745 = vunpack.c.l.b16 %v157
  %v746 = vunpack.c.h.b16 %v157
  %v747 = vunpack.c.l.b16 %v158
  %v748 = vunpack.c.h.b16 %v158
  %v749 = vunpack.c.l.b16 %v159
  %v750 = vunpack.c.h.b16 %v159
  %v751 = vunpack.c.l.b16 %v160
  %v752 = vunpack.c.h.b16 %v160
  %v753 = vunpack.c.l.b16 %v161
  %v754 = vunpack.c.h.b16 %v161
  %v755 = vunpack.c.l.b16 %v162
  %v756 = vunpack.c.h.b16 %v162
  %v757 = vunpack.c.l.b16 %v163
  %v758 = vunpack.c.h.b16 %v163
  %v759 = vunpack.c.l.b16 %v164
  %v760 = vunpack.c.h.b16 %v164
  %v761 = vunpack.c.l.b16 %v165
  %v762 = vunpack.c.h.b16 %v165
  %v763 = vunpack.c.l.b16 %v166
  %v764 = vunpack.c.h.b16 %v166
  %v765 = vunpack.c.l.b16 %v167
  %v766 = vunpack.c.h.b16 %v167
  %v767 = vunpack.c.l.b16 %v168
  %v768 = vunpack.c.h.b16 %v168
  %v769 = vunpack.c.l.b16 %v169
  %v770 = vunpack.c.h.b16 %v169
  %v771 = vunpack.c.l.b16 %v170
  %v772 = vunpack.c.h.b16 %v170
  %v773 = vunpack.c.l.b16 %v171
  %v774 = vunpack.c.h.b16 %v171
  %v775 = vunpack.c.l.b16 %v172
  %v776 = vunpack.c.h.b16 %v172
  %v777 = vunpack.c.l.b16 %v173
  %v778 = vunpack.c.h.b16 %v173
  %v779 = vunpack.c.l.b16 %v174
  %v780 = vunpack.c.h.b16 %v174
  %v781 = vunpack.c.l.b16 %v175
  %v782 = vunpack.c.h.b16 %v175
  %v783 = vunpack.c.l.b16 %v176
  %v784 = vunpack.c.h.b16 %v176
  %v785 = vunpack.c.l.b16 %v177
  %v786 = vunpack.c.h.b16 %v177
  %v787 = vunpack.c.l.b16 %v178
  %v788 = vunpack.c.h.b16 %v178
  %v789 = vunpack.c.l.b16 %v179
  %v790 = vunpack.c.h.b16 %v179
  %v791 = vunpack.c.l.b16 %v180
  %v792 = vunpack.c.h.b16 %v180
  %v793 = vunpack.c.l.b16 %v181
  %v794 = vunpack.c.h.b16 %v181
  %v795 = vunpack.c.l.b16 %v182
  %v796 = vunpack.c.h.b16 %v182
  %v797 = vunpack.c.l.b16 %v183
  %v798 = vunpack.c.h.b16 %v183
  %v799 = vunpack.c.l.b16 %v184
  %v800 = vunpack.c.h.b16 %v184
  %v801 = vunpack.c.l.b16 %v185
  %v802 = vunpack.c.h.b16 %v185
  %v803 = vunpack.c.l.b16 %v186
  %v804 = vunpack.c.h.b16 %v186
  %v805 = vunpack.c.l.b16 %v187
  %v806 = vunpack.c.h.b16 %v187
  %v807 = vunpack.c.l.b16 %v188
  %v808 = vunpack.c.h.b16 %v188
  %v809 = vunpack.c.l.b16 %v189
  %v810 = vunpack.c.h.b16 %v189
  %v811 = vunpack.c.l.b16 %v190
  %v812 = vunpack.c.h.b16 %v190
  %v813 = vunpack.c.l.b16 %v191
  %v814 = vunpack.c.h.b16 %v191
  %v815 = vunpack.c.l.b16 %v192
  %v816 = vunpack.c.h.b16 %v192
  %v817 = vunpack.c.l.b16 %v193
  %v818 = vunpack.c.h.b16 %v193
  %v819 = vunpack.c.l.b16 %v194
  %v820 = vunpack.c.h.b16 %v194
  %v821 = vunpack.c.l.b16 %v195
  %v822 = vunpack.c.h.b16 %v195
  %v823 = vunpack.c.l.b16 %v196
  %v824 = vunpack.c.h.b16 %v196
  %v825 = vunpack.c.l.b16 %v197
  %v826 = vunpack.c.h.b16 %v197
  %v827 = vunpack.c.l.b16 %v198
  %v828 = vunpack.c.h.b16 %v198
  %v829 = vunpack.c.l.b16 %v199
  %v830 = vunpack.c.h.b16 %v199
  %v831 = vunpack.c.l.b16 %v200
  %v832 = vunpack.c.h.b16 %v200
  %v833 = vunpack.c.l.b16 %v201
  %v834 = vunpack.c.h.b16 %v201
  %v835 = vunpack.c.l.b16 %v202
  %v836 = vunpack.c.h.b16 %v202
  %v837 = vunpack.c.l.b16 %v203
  %v838 = vunpack.c.h.b16 %v203
  %v839 = vunpack.c.l.b16 %v204
  %v840 = vunpack.c.h.b16 %v204
  %v841 = vunpack.c.l.b16 %v205
  %v842 = vunpack.c.h.b16 %v205
  %v843 = vunpack.c.l.b16 %v206
  %v844 = vunpack.c.h.b16 %v206
  %v845 = vunpack.c.l.b16 %v207
  %v846 = vunpack.c.h.b16 %v207
  %v847 = vunpack.c.l.b16 %v208
  %v848 = vunpack.c.h.b16 %v208
  %v849 = vunpack.c.l.b16 %v209
  %v850 = vunpack.c.h.b16 %v209
  %v851 = vunpack.c.l.b16 %v210
  %v852 = vunpack.c.h.b16 %v210
  %v853 = vunpack.c.l.b16 %v211
  %v854 = vunpack.c.h.b16 %v211
  %v855 = vunpack.c.l.b16 %v212
  %v856 = vunpack.c.h.b16 %v212
  %v857 = vunpack.c.l.b16 %v213
  %v858 = vunpack.c.h.b16 %v213
  %v859 = vunpack.c.l.b16 %v214
  %v860 = vunpack.c.h.b16 %v214
  %v861 = vunpack.c.l.b16 %v215
  %v862 = vunpack.c.h.b16 %v215
  %v863 = vunpack.c.l.b16 %v216
  %v864 = vunpack.c.h.b16 %v216
  %v865 = vunpack.c.l.b16 %v217
  %v866 = vunpack.c.h.b16 %v217
  %v867 = vunpack.c.l.b16 %v218
  %v868 = vunpack.c.h.b16 %v218
  %v869 = vunpack.c.l.b16 %v219
  %v870 = vunpack.c.h.b16 %v219
  %v871 = vunpack.c.l.b16 %v220
  %v872 = vunpack.c.h.b16 %v220
  %v873 = vunpack.c.l.b16 %v221
  %v874 = vunpack.c.h.b16 %v221
  %v875 = vunpack.c.l.b16 %v222
  %v876 = vunpack.c.h.b16 %v222
  %v877 = vunpack.c.l.b16 %v223
  %v878 = vunpack.c.h.b16 %v223
  %v879 = vunpack.c.l.b16 %v224
  %v880 = vunpack.c.h.b16 %v224
  %v881 = vunpack.c.l.b16 %v225
  %v882 = vunpack.c.h.b16 %v225
  %v883 = vunpack.c.l.b16 %v226
  %v884 = vunpack.c.h.b16 %v226
  %v885 = vunpack.c.l.b16 %v227
  %v886 = vunpack.c.h.b16 %v227
  %v887 = vunpack.c.l.b16 %v228
  %v888 = vunpack.c.h.b16 %v228
  %v889 = vunpack.c.l.b16 %v229
  %v890 = vunpack.c.h.b16 %v229
  %v891 = vunpack.c.l.b16 %v230
  %v892 = vunpack.c.h.b16 %v230
  %v893 = vunpack.c.l.b16 %v231
  %v894 = vunpack.c.h.b16 %v231
  %v895 = vunpack.c.l.b16 %v232
  %v896 = vunpack.c.h.b16 %v232
  %v897 = vunpack.c.l.b16 %v233
  %v898 = vunpack.c.h.b16 %v233
  %v899 = vunpack.c.l.b16 %v234
  %v900 = vunpack.c.h.b16 %v234
  %v901 = vunpack.c.l.b16 %v235
  %v902 = vunpack.c.h.b16 %v235
  %v903 = vunpack.c.l.b16 %v236
  %v904 = vunpack.c.h.b16 %v236
  %v905 = vunpack.c.l.b16 %v237
  %v906 = vunpack.c.h.b16 %v237
  %v907 = vunpack.c.l.b16 %v238
  %v908 = vunpack.c.h.b16 %v238
  %v909 = vunpack.c.l.b16 %v239
  %v910 = vunpack.c.h.b16 %v239
  %v911 = vunpack.c.l.b16 %v240
  %v912 = vunpack.c.h.b16 %v240
  %v913 = vunpack.c.l.b16 %v241
  %v914 = vunpack.c.h.b16 %v241
  %v915 = vunpack.c.l.b16 %v242
  %v916 = vunpack.c.h.b16 %v242
  %v917 = vunpack.c.l.b16 %v243
  %v918 = vunpack.c.h.b16 %v243
  %v919 = vunpack.c.l.b16 %v244
  %v920 = vunpack.c.h.b16 %v244
  %v921 = vunpack.c.l.b16 %v245
  %v922 = vunpack.c.h.b16 %v245
  %v923 = vunpack.c.l.b16 %v246
  %v924 = vunpack.c.h.b16 %v246
  %v925 = vunpack.c.l.b16 %v247
  %v926 = vunpack.c.h.b16 %v247
  %v927 = vunpack.c.l.b16 %v248
  %v928 = vunpack.c.h.b16 %v248
  %v929 = vunpack.c.l.b16 %v249
  %v930 = vunpack.c.h.b16 %v249
  %v931 = vunpack.c.l.b16 %v250
  %v932 = vunpack.c.h.b16 %v250
  %v933 = vunpack.c.l.b16 %v251
  %v934 = vunpack.c.h.b16 %v251
  %v935 = vunpack.c.l.b16 %v252
  %v936 = vunpack.c.h.b16 %v252
  %v937 = vunpack.c.l.b16 %v253
  %v938 = vunpack.c.h.b16 %v253
  %v939 = vunpack.c.l.b16 %v254
  %v940 = vunpack.c.h.b16 %v254
  %v941 = vunpack.c.l.b16 %v255
  %v942 = vunpack.c.h.b16 %v255
  %v943 = vunpack.c.l.b16 %v256
  %v944 = vunpack.c.h.b16 %v256
  %v945 = vunpack.c.l.b16 %v257
  %v946 = vunpack.c.h.b16 %v257
  %v947 = vunpack.c.l.b16 %v258
  %v948 = vunpack.c.h.b16 %v258
  %v949 = vunpack.c.l.b16 %v259
  %v950 = vunpack.c.h.b16 %v259
  %v951 = vunpack.c.l.b16 %v260
  %v952 = vunpack.c.h.b16 %v260
  %v953 = vunpack.c.l.b16 %v261
  %v954 = vunpack.c.h.b16 %v261
  %v955 = vunpack.c.l.b16 %v262
  %v956 = vunpack.c.h.b16 %v262
  %v957 = vunpack.c.l.b16 %v263
  %v958 = vunpack.c.h.b16 %v263
  %v959 = vunpack.c.l.b16 %v264
  %v960 = vunpack.c.h.b16 %v264
  %v961 = vunpack.c.l.b16 %v265
  %v962 = vunpack.c.h.b16 %v265
  %v963 = vunpack.c.l.b16 %v266
  %v964 = vunpack.c.h.b16 %v266
  %v965 = vunpack.c.l.b16 %v267
  %v966 = vunpack.c.h.b16 %v267
  %v967 = vunpack.c.l.b16 %v268
  %v968 = vunpack.c.h.b16 %v268
  %v969 = vunpack.c.l.b16 %v269
  %v970 = vunpack.c.h.b16 %v269
  %v971 = vunpack.c.l.b16 %v270
  %v972 = vunpack.c.h.b16 %v270
  %v973 = vunpack.c.l.b16 %v271
  %v974 = vunpack.c.h.b16 %v271
  %v975 = vunpack.c.l.b16 %v272
  %v976 = vunpack.c.h.b16 %v272
  %v977 = vunpack.c.l.b16 %v273
  %v978 = vunpack.c.h.b16 %v273
  %v979 = vunpack.c.l.b16 %v274
  %v980 = vunpack.c.h.b16 %v274
  %v981 = vunpack.c.l.b16 %v275
  %v982 = vunpack.c.h.b16 %v275
  %v983 = vunpack.c.l.b16 %v276
  %v984 = vunpack.c.h.b16 %v276
  %v985 = vunpack.c.l.b16 %v277
  %v986 = vunpack.c.h.b16 %v277
  %v987 = vunpack.c.l.b16 %v278
  %v988 = vunpack.c.h.b16 %v278
  %v989 = vunpack.c.l.b16 %v279
  %v990 = vunpack.c.h.b16 %v279
  %v991 = vunpack.c.l.b16 %v280
  %v992 = vunpack.c.h.b16 %v280
  %v993 = vunpack.c.l.b16 %v281
  %v994 = vunpack.c.h.b16 %v281
  %v995 = vunpack.c.l.b16 %v282
  %v996 = vunpack.c.h.b16 %v282
  %v997 = vunpack.c.l.b16 %v283
  %v998 = vunpack.c.h.b16 %v283
  %v999 = vunpack.c.l.b16 %v284
  %v1000 = vunpack.c.h.b16 %v284
  %v1001 = vunpack.c.l.b16 %v285
  %v1002 = vunpack.c.h.b16 %v285
  %v1003 = vunpack.c.l.b16 %v286
  %v1004 = vunpack.c.h.b16 %v286
  %v1005 = vunpack.c.l.b16 %v287
  %v1006 = vunpack.c.h.b16 %v287
  %v1007 = vunpack.c.l.b16 %v288
  %v1008 = vunpack.c.h.b16 %v288
  %v1009 = vunpack.c.l.b16 %v289
  %v1010 = vunpack.c.h.b16 %v289
  %v1011 = vunpack.c.l.b16 %v290
  %v1012 = vunpack.c.h.b16 %v290
  %v1013 = vunpack.c.l.b16 %v291
  %v1014 = vunpack.c.h.b16 %v291
  %v1015 = vunpack.c.l.b16 %v292
  %v1016 = vunpack.c.h.b16 %v292
  %v1017 = vunpack.c.l.b16 %v293
  %v1018 = vunpack.c.h.b16 %v293
  %v1019 = vunpack.c.l.b16 %v294
  %v1020 = vunpack.c.h.b16 %v294
  %v1021 = vunpack.c.l.b16 %v295
  %v1022 = vunpack.c.h.b16 %v295
  %v1023 = vunpack.c.l.b16 %v296
  %v1024 = vunpack.c.h.b16 %v296
  %v1025 = vunpack.c.l.b16 %v297
  %v1026 = vunpack.c.h.b16 %v297
  %v1027 = vunpack.c.l.b16 %v298
  %v1028 = vunpack.c.h.b16 %v298
  %v1029 = vunpack.c.l.b16 %v299
  %v1030 = vunpack.c.h.b16 %v299
  %v1031 = vunpack.c.l.b16 %v300
  %v1032 = vunpack.c.h.b16 %v300
  %v1033 = vunpack.c.l.b16 %v301
  %v1034 = vunpack.c.h.b16 %v301
  %v1035 = vunpack.c.l.b16 %v302
  %v1036 = vunpack.c.h.b16 %v302
  %v1037 = vunpack.c.l.b16 %v303
  %v1038 = vunpack.c.h.b16 %v303
  %v1039 = vunpack.c.l.b16 %v304
  %v1040 = vunpack.c.h.b16 %v304
  %v1041 = vunpack.c.l.b16 %v305
  %v1042 = vunpack.c.h.b16 %v305
  %v1043 = vunpack.c.l.b16 %v306
  %v1044 = vunpack.c.h.b16 %v306
  %v1045 = vunpack.c.l.b16 %v307
  %v1046 = vunpack.c.h.b16 %v307
  %v1047 = vunpack.c.l.b16 %v308
  %v1048 = vunpack.c.h.b16 %v308
  %v1049 = vunpack.c.l.b16 %v309
  %v1050 = vunpack.c.h.b16 %v309
  %v1051 = vunpack.c.l.b16 %v310
  %v1052 = vunpack.c.h.b16 %v310
  %v1053 = vunpack.c.l.b16 %v311
  %v1054 = vunpack.c.h.b16 %v311
  %v1055 = vunpack.c.l.b16 %v312
  %v1056 = vunpack.c.h.b16 %v312
  %v1057 = vunpack.c.l.b16 %v313
  %v1058 = vunpack.c.h.b16 %v313
  %v1059 = vunpack.c.l.b16 %v314
  %v1060 = vunpack.c.h.b16 %v314
  %v1061 = vunpack.c.l.b16 %v315
  %v1062 = vunpack.c.h.b16 %v315
  %v1063 = vunpack.c.l.b16 %v316
  %v1064 = vunpack.c.h.b16 %v316
  %v1065 = vunpack.c.l.b16 %v317
  %v1066 = vunpack.c.h.b16 %v317
  %v1067 = vunpack.c.l.b16 %v318
  %v1068 = vunpack.c.h.b16 %v318
  %v1069 = vunpack.c.l.b16 %v319
  %v1070 = vunpack.c.h.b16 %v319
  %v1071 = vunpack.c.l.b16 %v320
  %v1072 = vunpack.c.h.b16 %v320
  %v1073 = vunpack.c.l.b16 %v321
  %v1074 = vunpack.c.h.b16 %v321
  %v1075 = vunpack.c.l.b16 %v322
  %v1076 = vunpack.c.h.b16 %v322
  %v1077 = vunpack.c.l.b16 %v323
  %v1078 = vunpack.c.h.b16 %v323
  %v1079 = vunpack.c.l.b16 %v324
  %v1080 = vunpack.c.h.b16 %v324
  %v1081 = vunpack.c.l.b16 %v325
  %v1082 = vunpack.c.h.b16 %v325
  %v1083 = vunpack.c.l.b16 %v326
  %v1084 = vunpack.c.h.b16 %v326
  %v1085 = vunpack.c.l.b16 %v327
  %v1086 = vunpack.c.h.b16 %v327
  %v1087 = vunpack.c.l.b16 %v328
  %v1088 = vunpack.c.h.b16 %v328
  %v1089 = vunpack.c.l.b16 %v329
  %v1090 = vunpack.c.h.b16 %v329
  %v1091 = vunpack.c.l.b16 %v330
  %v1092 = vunpack.c.h.b16 %v330
  %v1093 = vunpack.c.l.b16 %v331
  %v1094 = vunpack.c.h.b16 %v331
  %v1095 = vunpack.c.l.b16 %v332
  %v1096 = vunpack.c.h.b16 %v332
  %v1097 = vunpack.c.l.b16 %v333
  %v1098 = vunpack.c.h.b16 %v333
  %v1099 = vunpack.c.l.b16 %v334
  %v1100 = vunpack.c.h.b16 %v334
  %v1101 = vunpack.c.l.b16 %v335
  %v1102 = vunpack.c.h.b16 %v335
  %v1103 = vunpack.c.l.b16 %v336
  %v1104 = vunpack.c.h.b16 %v336
  %v1105 = vunpack.c.l.b16 %v337
  %v1106 = vunpack.c.h.b16 %v337
  %v1107 = vunpack.c.l.b16 %v338
  %v1108 = vunpack.c.h.b16 %v338
  %v1109 = vunpack.c.l.b16 %v339
  %v1110 = vunpack.c.h.b16 %v339
  %v1111 = vunpack.c.l.b16 %v340
  %v1112 = vunpack.c.h.b16 %v340
  %v1113 = vunpack.c.l.b16 %v341
  %v1114 = vunpack.c.h.b16 %v341
  %v1115 = vunpack.c.l.b16 %v342
  %v1116 = vunpack.c.h.b16 %v342
  %v1117 = vunpack.c.l.b16 %v343
  %v1118 = vunpack.c.h.b16 %v343
  %v1119 = vunpack.c.l.b16 %v344
  %v1120 = vunpack.c.h.b16 %v344
  %v1121 = vunpack.c.l.b16 %v345
  %v1122 = vunpack.c.h.b16 %v345
  %v1123 = vunpack.c.l.b16 %v346
  %v1124 = vunpack.c.h.b16 %v346
  %v1125 = vpack.c.b16 %v629, %v613
  %v1126 = vpack.c.b16 %v630, %v614
  %v1127 = vpack.c.b16 %v631, %v615
  %v1128 = vpack.c.b16 %v632, %v616
  %v1129 = vpack.c.b16 %v633, %v617
  %v1130 = vpack.c.b16 %v634, %v618
  %v1131 = vpack.c.b16 %v635, %v619
  %v1132 = vpack.c.b16 %v636, %v620
  %v1133 = vpack.c.b16 %v637, %v621
  %v1134 = vpack.c.b16 %v638, %v622
  %v1135 = vpack.c.b16 %v639, %v623
  %v1136 = vpack.c.b16 %v640, %v624
  %v1137 = vpack.c.b16 %v641, %v625
  %v1138 = vpack.c.b16 %v642, %v626
  %v1139 = vpack.c.b16 %v643, %v627
  %v1140 = vpack.c.b16 %v644, %v628
  %v1141 = vpack.c.b16 %v661, %v645
  %v1142 = vpack.c.b16 %v662, %v646
  %v1143 = vpack.c.b16 %v663, %v647
  %v1144 = vpack.c.b16 %v664, %v648
  %v1145 = vpack.c.b16 %v665, %v649
  %v1146 = vpack.c.b16 %v666, %v650
  %v1147 = vpack.c.b16 %v667, %v651
  %v1148 = vpack.c.b16 %v668, %v652
  %v1149 = vpack.c.b16 %v669, %v653
  %v1150 = vpack.c.b16 %v670, %v654
  %v1151 = vpack.c.b16 %v671, %v655
  %v1152 = vpack.c.b16 %v672, %v656
  %v1153 = vpack.c.b16 %v673, %v657
  %v1154 = vpack.c.b16 %v674, %v658
  %v1155 = vpack.c.b16 %v675, %v659
  %v1156 = vpack.c.b16 %v676, %v660
  %v1157 = vpack.c.b16 %v693, %v677
  %v1158 = vpack.c.b16 %v694, %v678
  %v1159 = vpack.c.b16 %v695, %v679
  %v1160 = vpack.c.b16 %v696, %v680
  %v1161 = vpack.c.b16 %v697, %v681
  %v1162 = vpack.c.b16 %v698, %v682
  %v1163 = vpack.c.b16 %v699, %v683
  %v1164 = vpack.c.b16 %v700, %v684
  %v1165 = vpack.c.b16 %v701, %v685
  %v1166 = vpack.c.b16 %v702, %v686
  %v1167 = vpack.c.b16 %v703, %v687
  %v1168 = vpack.c.b16 %v704, %v688
  %v1169 = vpack.c.b16 %v705, %v689
  %v1170 = vpack.c.b16 %v706, %v690
  %v1171 = vpack.c.b16 %v707, %v691
  %v1172 = vpack.c.b16 %v708, %v692
  %v1173 = vpack.c.b16 %v725, %v709
  %v1174 = vpack.c.b16 %v726, %v710
  %v1175 = vpack.c.b16 %v727, %v711
  %v1176 = vpack.c.b16 %v728, %v712
  %v1177 = vpack.c.b16 %v729, %v713
  %v1178 = vpack.c.b16 %v730, %v714
  %v1179 = vpack.c.b16 %v731, %v715
  %v1180 = vpack.c.b16 %v732, %v716
  %v1181 = vpack.c.b16 %v733, %v717
  %v1182 = vpack.c.b16 %v734, %v718
  %v1183 = vpack.c.b16 %v735, %v719
  %v1184 = vpack.c.b16 %v736, %v720
  %v1185 = vpack.c.b16 %v737, %v721
  %v1186 = vpack.c.b16 %v738, %v722
  %v1187 = vpack.c.b16 %v739, %v723
  %v1188 = vpack.c.b16 %v740, %v724
  %v1189 = vpack.c.b16 %v757, %v741
  %v1190 = vpack.c.b16 %v758, %v742
  %v1191 = vpack.c.b16 %v759, %v743
  %v1192 = vpack.c.b16 %v760, %v744
  %v1193 = vpack.c.b16 %v761, %v745
  %v1194 = vpack.c.b16 %v762, %v746
  %v1195 = vpack.c.b16 %v763, %v747
  %v1196 = vpack.c.b16 %v764, %v748
  %v1197 = vpack.c.b16 %v765, %v749
  %v1198 = vpack.c.b16 %v766, %v750
  %v1199 = vpack.c.b16 %v767, %v751
  %v1200 = vpack.c.b16 %v768, %v752
  %v1201 = vpack.c.b16 %v769, %v753
  %v1202 = vpack.c.b16 %v770, %v754
  %v1203 = vpack.c.b16 %v771, %v755
  %v1204 = vpack.c.b16 %v772, %v756
  %v1205 = vpack.c.b16 %v789, %v773
  %v1206 = vpack.c.b16 %v790, %v774
  %v1207 = vpack.c.b16 %v791, %v775
  %v1208 = vpack.c.b16 %v792, %v776
  %v1209 = vpack.c.b16 %v793, %v777
  %v1210 = vpack.c.b16 %v794, %v778
  %v1211 = vpack.c.b16 %v795, %v779
  %v1212 = vpack.c.b16 %v796, %v780
  %v1213 = vpack.c.b16 %v797, %v781
  %v1214 = vpack.c.b16 %v798, %v782
  %v1215 = vpack.c.b16 %v799, %v783
  %v1216 = vpack.c.b16 %v800, %v784
  %v1217 = vpack.c.b16 %v801, %v785
  %v1218 = vpack.c.b16 %v802, %v786
  %v1219 = vpack.c.b16 %v803, %v787
  %v1220 = vpack.c.b16 %v804, %v788
  %v1221 = vpack.c.b16 %v821, %v805
  %v1222 = vpack.c.b16 %v822, %v806
  %v1223 = vpack.c.b16 %v823, %v807
  %v1224 = vpack.c.b16 %v824, %v808
  %v1225 = vpack.c.b16 %v825, %v809
  %v1226 = vpack.c.b16 %v826, %v810
  %v1227 = vpack.c.b16 %v827, %v811
  %v1228 = vpack.c.b16 %v828, %v812
  %v1229 = vpack.c.b16 %v829, %v813
  %v1230 = vpack.c.b16 %v830, %v814
  %v1231 = vpack.c.b16 %v831, %v815
  %v1232 = vpack.c.b16 %v832, %v816
  %v1233 = vpack.c.b16 %v833, %v817
  %v1234 = vpack.c.b16 %v834, %v818
  %v1235 = vpack.c.b16 %v835, %v819
  %v1236 = vpack.c.b16 %v836, %v820
  %v1237 = vpack.c.b16 %v853, %v837
  %v1238 = vpack.c.b16 %v854, %v838
  %v1239 = vpack.c.b16 %v855, %v839
  %v1240 = vpack.c.b16 %v856, %v840
  %v1241 = vpack.c.b16 %v857, %v841
  %v1242 = vpack.c.b16 %v858, %v842
  %v1243 = vpack.c.b16 %v859, %v843
  %v1244 = vpack.c.b16 %v860, %v844
  %v1245 = vpack.c.b16 %v861, %v845
  %v1246 = vpack.c.b16 %v862, %v846
  %v1247 = vpack.c.b16 %v863, %v847
  %v1248 = vpack.c.b16 %v864, %v848
  %v1249 = vpack.c.b16 %v865, %v849
  %v1250 = vpack.c.b16 %v866, %v850
  %v1251 = vpack.c.b16 %v867, %v851
  %v1252 = vpack.c.b16 %v868, %v852
  %v1253 = vpack.c.b16 %v885, %v869
  %v1254 = vpack.c.b16 %v886, %v870
  %v1255 = vpack.c.b16 %v887, %v871
  %v1256 = vpack.c.b16 %v888, %v872
  %v1257 = vpack.c.b16 %v889, %v873
  %v1258 = vpack.c.b16 %v890, %v874
  %v1259 = vpack.c.b16 %v891, %v875
  %v1260 = vpack.c.b16 %v892, %v876
  %v1261 = vpack.c.b16 %v893, %v877
  %v1262 = vpack.c.b16 %v894, %v878
  %v1263 = vpack.c.b16 %v895, %v879
  %v1264 = vpack.c.b16 %v896, %v880
  %v1265 = vpack.c.b16 %v897, %v881
  %v1266 = vpack.c.b16 %v898, %v882
  %v1267 = vpack.c.b16 %v899, %v883
  %v1268 = vpack.c.b16 %v900, %v884
  %v1269 = vpack.c.b16 %v917, %v901
  %v1270 = vpack.c.b16 %v918, %v902
  %v1271 = vpack.c.b16 %v919, %v903
  %v1272 = vpack.c.b16 %v920, %v904
  %v1273 = vpack.c.b16 %v921, %v905
  %v1274 = vpack.c.b16 %v922, %v906
  %v1275 = vpack.c.b16 %v923, %v907
  %v1276 = vpack.c.b16 %v924, %v908
  %v1277 = vpack.c.b16 %v925, %v909
  %v1278 = vpack.c.b16 %v926, %v910
  %v1279 = vpack.c.b16 %v927, %v911
  %v1280 = vpack.c.b16 %v928, %v912
  %v1281 = vpack.c.b16 %v929, %v913
  %v1282 = vpack.c.b16 %v930, %v914
  %v1283 = vpack.c.b16 %v931, %v915
  %v1284 = vpack.c.b16 %v932, %v916
  %v1285 = vpack.c.b16 %v949, %v933
  %v1286 = vpack.c.b16 %v950, %v934
  %v1287 = vpack.c.b16 %v951, %v935
  %v1288 = vpack.c.b16 %v952, %v936
  %v1289 = vpack.c.b16 %v953, %v937
  %v1290 = vpack.c.b16 %v954, %v938
  %v1291 = vpack.c.b16 %v955, %v939
  %v1292 = vpack.c.b16 %v956, %v940
  %v1293 = vpack.c.b16 %v957, %v941
  %v1294 = vpack.c.b16 %v958, %v942
  %v1295 = vpack.c.b16 %v959, %v943
  %v1296 = vpack.c.b16 %v960, %v944
  %v1297 = vpack.c.b16 %v961, %v945
  %v1298 = vpack.c.b16 %v962, %v946
  %v1299 = vpack.c.b16 %v963, %v947
  %v1300 = vpack.c.b16 %v964, %v948
  %v1301 = vpack.c.b16 %v981, %v965
  %v1302 = vpack.c.b16 %v982, %v966
  %v1303 = vpack.c.b16 %v983, %v967
  %v1304 = vpack.c.b16 %v984, %v968
  %v1305 = vpack.c.b16 %v985, %v969
  %v1306 = vpack.c.b16 %v986, %v970
  %v1307 = vpack.c.b16 %v987, %v971
  %v1308 = vpack.c.b16 %v988, %v972
  %v1309 = vpack.c.b16 %v989, %v973
  %v1310 = vpack.c.b16 %v990, %v974
  %v1311 = vpack.c.b16 %v991, %v975
  %v1312 = vpack.c.b16 %v992, %v976
  %v1313 = vpack.c.b16 %v993, %v977
  %v1314 = vpack.c.b16 %v994, %v978
  %v1315 = vpack.c.b16 %v995, %v979
  %v1316 = vpack.c.b16 %v996, %v980
  %v1317 = vpack.c.b16 %v1013, %v997
  %v1318 = vpack.c.b16 %v1014, %v998
  %v1319 = vpack.c.b16 %v1015, %v999
  %v1320 = vpack.c.b16 %v1016, %v1000
  %v1321 = vpack.c.b16 %v1017, %v1001
  %v1322 = vpack.c.b16 %v1018, %v1002
  %v1323 = vpack.c.b16 %v1019, %v1003
  %v1324 = vpack.c.b16 %v1020, %v1004
  %v1325 = vpack.c.b16 %v1021, %v1005
  %v1326 = vpack.c.b16 %v1022, %v1006
  %v1327 = vpack.c.b16 %v1023, %v1007
  %v1328 = vpack.c.b16 %v1024, %v1008
  %v1329 = vpack.c.b16 %v1025, %v1009
  %v1330 = vpack.c.b16 %v1026, %v1010
  %v1331 = vpack.c.b16 %v1027, %v1011
  %v1332 = vpack.c.b16 %v1028, %v1012
  %v1333 = vpack.c.b16 %v1045, %v1029
  %v1334 = vpack.c.b16 %v1046, %v1030
  %v1335 = vpack.c.b16 %v1047, %v1031
  %v1336 = vpack.c.b16 %v1048, %v1032
  %v1337 = vpack.c.b16 %v1049, %v1033
  %v1338 = vpack.c.b16 %v1050, %v1034
  %v1339 = vpack.c.b16 %v1051, %v1035
  %v1340 = vpack.c.b16 %v1052, %v1036
  %v1341 = vpack.c.b16 %v1053, %v1037
  %v1342 = vpack.c.b16 %v1054, %v1038
  %v1343 = vpack.c.b16 %v1055, %v1039
  %v1344 = vpack.c.b16 %v1056, %v1040
  %v1345 = vpack.c.b16 %v1057, %v1041
  %v1346 = vpack.c.b16 %v1058, %v1042
  %v1347 = vpack.c.b16 %v1059, %v1043
  %v1348 = vpack.c.b16 %v1060, %v1044
  %v1349 = vpack.c.b16 %v1077, %v1061
  %v1350 = vpack.c.b16 %v1078, %v1062
  %v1351 = vpack.c.b16 %v1079, %v1063
  %v1352 = vpack.c.b16 %v1080, %v1064
  %v1353 = vpack.c.b16 %v1081, %v1065
  %v1354 = vpack.c.b16 %v1082, %v1066
  %v1355 = vpack.c.b16 %v1083, %v1067
  %v1356 = vpack.c.b16 %v1084, %v1068
  %v1357 = vpack.c.b16 %v1085, %v1069
  %v1358 = vpack.c.b16 %v1086, %v1070
  %v1359 = vpack.c.b16 %v1087, %v1071
  %v1360 = vpack.c.b16 %v1088, %v1072
  %v1361 = vpack.c.b16 %v1089, %v1073
  %v1362 = vpack.c.b16 %v1090, %v1074
  %v1363 = vpack.c.b16 %v1091, %v1075
  %v1364 = vpack.c.b16 %v1092, %v1076
  %v1365 = vpack.c.b16 %v1109, %v1093
  %v1366 = vpack.c.b16 %v1110, %v1094
  %v1367 = vpack.c.b16 %v1111, %v1095
  %v1368 = vpack.c.b16 %v1112, %v1096
  %v1369 = vpack.c.b16 %v1113, %v1097
  %v1370 = vpack.c.b16 %v1114, %v1098
  %v1371 = vpack.c.b16 %v1115, %v1099
  %v1372 = vpack.c.b16 %v1116, %v1100
  %v1373 = vpack.c.b16 %v1117, %v1101
  %v1374 = vpack.c.b16 %v1118, %v1102
  %v1375 = vpack.c.b16 %v1119, %v1103
  %v1376 = vpack.c.b16 %v1120, %v1104
  %v1377 = vpack.c.b16 %v1121, %v1105
  %v1378 = vpack.c.b16 %v1122, %v1106
  %v1379 = vpack.c.b16 %v1123, %v1107
  %v1380 = vpack.c.b16 %v1124, %v1108
  %1637 = vmatprep.subr.bf16.mxu0 %v1238
  %1638 = vmatpush1.bf16.msra.mxu0 %v1237
  %1639 = vmatprep.subr.bf16.mxu0 %v1222
  %1640 = vmatpush1.bf16.msra.mxu0 %v1221
  %1641 = vmatprep.subr.bf16.mxu0 %v1206
  %1642 = vmatpush1.bf16.msra.mxu0 %v1205
  %1643 = vmatprep.subr.bf16.mxu0 %v1190
  %1644 = vmatpush1.bf16.msra.mxu0 %v1189
  %1645 = vmatprep.subr.bf16.mxu0 %v1174
  %1646 = vmatpush1.bf16.msra.mxu0 %v1173
  %1647 = vmatprep.subr.bf16.mxu0 %v1158
  %1648 = vmatpush1.bf16.msra.mxu0 %v1157
  %1649 = vmatprep.subr.bf16.mxu0 %v1142
  %1650 = vmatpush1.bf16.msra.mxu0 %v1141
  %1651 = vmatprep.subr.bf16.mxu0 %v1126
  %1652 = vmatpush1.bf16.msra.mxu0 %v1125
  %1653 = vmatprep.subr.bf16.mxu0 %v1366
  %1654 = vmatpush2.bf16.msra.mxu0 %v1365
  %1655 = vmatprep.subr.bf16.mxu0 %v1350
  %1656 = vmatpush2.bf16.msra.mxu0 %v1349
  %1657 = vmatprep.subr.bf16.mxu0 %v1334
  %1658 = vmatpush2.bf16.msra.mxu0 %v1333
  %1659 = vmatprep.subr.bf16.mxu0 %v1318
  %1660 = vmatpush2.bf16.msra.mxu0 %v1317
  %1661 = vmatprep.subr.bf16.mxu0 %v1302
  %1662 = vmatpush2.bf16.msra.mxu0 %v1301
  %1663 = vmatprep.subr.bf16.mxu0 %v1286
  %1664 = vmatpush2.bf16.msra.mxu0 %v1285
  %1665 = vmatprep.subr.bf16.mxu0 %v1270
  %1666 = vmatpush2.bf16.msra.mxu0 %v1269
  %1667 = vmatprep.subr.bf16.mxu0 %v1254
  %1668 = vmatpush2.bf16.msra.mxu0 %v1253
  %1669 = vmatprep.mubr.bf16.mxu0 %v354
  %1670 = vmatmul.mubr.bf16.gmra.mxu0 %v353
  %v1671 = vpop.f32.mrf.mxu0
  %v1672 = vadd.f32 0.0, %v1671
  %v1673 = vpop.f32.mrf.mxu0
  %v1674 = vadd.f32 0.0, %v1673
  %v1675 = vpop.f32.mrf.mxu0
  %v1676 = vadd.f32 0.0, %v1675
  %v1677 = vpop.f32.mrf.mxu0
  %v1678 = vadd.f32 0.0, %v1677
  %1679 = vdwg.mxu0
  %1680 = vmatprep.subr.bf16.mxu0 %v1240
  %1681 = vmatpush1.bf16.msra.mxu0 %v1239
  %1682 = vmatprep.subr.bf16.mxu0 %v1224
  %1683 = vmatpush1.bf16.msra.mxu0 %v1223
  %1684 = vmatprep.subr.bf16.mxu0 %v1208
  %1685 = vmatpush1.bf16.msra.mxu0 %v1207
  %1686 = vmatprep.subr.bf16.mxu0 %v1192
  %1687 = vmatpush1.bf16.msra.mxu0 %v1191
  %1688 = vmatprep.subr.bf16.mxu0 %v1176
  %1689 = vmatpush1.bf16.msra.mxu0 %v1175
  %1690 = vmatprep.subr.bf16.mxu0 %v1160
  %1691 = vmatpush1.bf16.msra.mxu0 %v1159
  %1692 = vmatprep.subr.bf16.mxu0 %v1144
  %1693 = vmatpush1.bf16.msra.mxu0 %v1143
  %1694 = vmatprep.subr.bf16.mxu0 %v1128
  %1695 = vmatpush1.bf16.msra.mxu0 %v1127
  %1696 = vmatprep.subr.bf16.mxu0 %v1368
  %1697 = vmatpush2.bf16.msra.mxu0 %v1367
  %1698 = vmatprep.subr.bf16.mxu0 %v1352
  %1699 = vmatpush2.bf16.msra.mxu0 %v1351
  %1700 = vmatprep.subr.bf16.mxu0 %v1336
  %1701 = vmatpush2.bf16.msra.mxu0 %v1335
  %1702 = vmatprep.subr.bf16.mxu0 %v1320
  %1703 = vmatpush2.bf16.msra.mxu0 %v1319
  %1704 = vmatprep.subr.bf16.mxu0 %v1304
  %1705 = vmatpush2.bf16.msra.mxu0 %v1303
  %1706 = vmatprep.subr.bf16.mxu0 %v1288
  %1707 = vmatpush2.bf16.msra.mxu0 %v1287
  %1708 = vmatprep.subr.bf16.mxu0 %v1272
  %1709 = vmatpush2.bf16.msra.mxu0 %v1271
  %1710 = vmatprep.subr.bf16.mxu0 %v1256
  %1711 = vmatpush2.bf16.msra.mxu0 %v1255
  %1712 = vmatprep.mubr.bf16.mxu0 %v354
  %1713 = vmatmul.mubr.bf16.gmra.mxu0 %v353
  %v1714 = vpop.f32.mrf.mxu0
  %v1715 = vadd.f32 0.0, %v1714
  %v1716 = vpop.f32.mrf.mxu0
  %v1717 = vadd.f32 0.0, %v1716
  %v1718 = vpop.f32.mrf.mxu0
  %v1719 = vadd.f32 0.0, %v1718
  %v1720 = vpop.f32.mrf.mxu0
  %v1721 = vadd.f32 0.0, %v1720
  %1722 = vdwg.mxu0
  %1723 = vmatprep.subr.bf16.mxu0 %v1242
  %1724 = vmatpush1.bf16.msra.mxu0 %v1241
  %1725 = vmatprep.subr.bf16.mxu0 %v1226
  %1726 = vmatpush1.bf16.msra.mxu0 %v1225
  %1727 = vmatprep.subr.bf16.mxu0 %v1210
  %1728 = vmatpush1.bf16.msra.mxu0 %v1209
  %1729 = vmatprep.subr.bf16.mxu0 %v1194
  %1730 = vmatpush1.bf16.msra.mxu0 %v1193
  %1731 = vmatprep.subr.bf16.mxu0 %v1178
  %1732 = vmatpush1.bf16.msra.mxu0 %v1177
  %1733 = vmatprep.subr.bf16.mxu0 %v1162
  %1734 = vmatpush1.bf16.msra.mxu0 %v1161
  %1735 = vmatprep.subr.bf16.mxu0 %v1146
  %1736 = vmatpush1.bf16.msra.mxu0 %v1145
  %1737 = vmatprep.subr.bf16.mxu0 %v1130
  %1738 = vmatpush1.bf16.msra.mxu0 %v1129
  %1739 = vmatprep.subr.bf16.mxu0 %v1370
  %1740 = vmatpush2.bf16.msra.mxu0 %v1369
  %1741 = vmatprep.subr.bf16.mxu0 %v1354
  %1742 = vmatpush2.bf16.msra.mxu0 %v1353
  %1743 = vmatprep.subr.bf16.mxu0 %v1338
  %1744 = vmatpush2.bf16.msra.mxu0 %v1337
  %1745 = vmatprep.subr.bf16.mxu0 %v1322
  %1746 = vmatpush2.bf16.msra.mxu0 %v1321
  %1747 = vmatprep.subr.bf16.mxu0 %v1306
  %1748 = vmatpush2.bf16.msra.mxu0 %v1305
  %1749 = vmatprep.subr.bf16.mxu0 %v1290
  %1750 = vmatpush2.bf16.msra.mxu0 %v1289
  %1751 = vmatprep.subr.bf16.mxu0 %v1274
  %1752 = vmatpush2.bf16.msra.mxu0 %v1273
  %1753 = vmatprep.subr.bf16.mxu0 %v1258
  %1754 = vmatpush2.bf16.msra.mxu0 %v1257
  %1755 = vmatprep.mubr.bf16.mxu0 %v354
  %1756 = vmatmul.mubr.bf16.gmra.mxu0 %v353
  %v1757 = vpop.f32.mrf.mxu0
  %v1758 = vadd.f32 0.0, %v1757
  %v1759 = vpop.f32.mrf.mxu0
  %v1760 = vadd.f32 0.0, %v1759
  %v1761 = vpop.f32.mrf.mxu0
  %v1762 = vadd.f32 0.0, %v1761
  %v1763 = vpop.f32.mrf.mxu0
  %v1764 = vadd.f32 0.0, %v1763
  %1765 = vdwg.mxu0
  %1766 = vmatprep.subr.bf16.mxu0 %v1244
  %1767 = vmatpush1.bf16.msra.mxu0 %v1243
  %1768 = vmatprep.subr.bf16.mxu0 %v1228
  %1769 = vmatpush1.bf16.msra.mxu0 %v1227
  %1770 = vmatprep.subr.bf16.mxu0 %v1212
  %1771 = vmatpush1.bf16.msra.mxu0 %v1211
  %1772 = vmatprep.subr.bf16.mxu0 %v1196
  %1773 = vmatpush1.bf16.msra.mxu0 %v1195
  %1774 = vmatprep.subr.bf16.mxu0 %v1180
  %1775 = vmatpush1.bf16.msra.mxu0 %v1179
  %1776 = vmatprep.subr.bf16.mxu0 %v1164
  %1777 = vmatpush1.bf16.msra.mxu0 %v1163
  %1778 = vmatprep.subr.bf16.mxu0 %v1148
  %1779 = vmatpush1.bf16.msra.mxu0 %v1147
  %1780 = vmatprep.subr.bf16.mxu0 %v1132
  %1781 = vmatpush1.bf16.msra.mxu0 %v1131
  %1782 = vmatprep.subr.bf16.mxu0 %v1372
  %1783 = vmatpush2.bf16.msra.mxu0 %v1371
  %1784 = vmatprep.subr.bf16.mxu0 %v1356
  %1785 = vmatpush2.bf16.msra.mxu0 %v1355
  %1786 = vmatprep.subr.bf16.mxu0 %v1340
  %1787 = vmatpush2.bf16.msra.mxu0 %v1339
  %1788 = vmatprep.subr.bf16.mxu0 %v1324
  %1789 = vmatpush2.bf16.msra.mxu0 %v1323
  %1790 = vmatprep.subr.bf16.mxu0 %v1308
  %1791 = vmatpush2.bf16.msra.mxu0 %v1307
  %1792 = vmatprep.subr.bf16.mxu0 %v1292
  %1793 = vmatpush2.bf16.msra.mxu0 %v1291
  %1794 = vmatprep.subr.bf16.mxu0 %v1276
  %1795 = vmatpush2.bf16.msra.mxu0 %v1275
  %1796 = vmatprep.subr.bf16.mxu0 %v1260
  %1797 = vmatpush2.bf16.msra.mxu0 %v1259
  %1798 = vmatprep.mubr.bf16.mxu0 %v354
  %1799 = vmatmul.mubr.bf16.gmra.mxu0 %v353
  %v1800 = vpop.f32.mrf.mxu0
  %v1801 = vadd.f32 0.0, %v1800
  %v1802 = vpop.f32.mrf.mxu0
  %v1803 = vadd.f32 0.0, %v1802
  %v1804 = vpop.f32.mrf.mxu0
  %v1805 = vadd.f32 0.0, %v1804
  %v1806 = vpop.f32.mrf.mxu0
  %v1807 = vadd.f32 0.0, %v1806
  %1808 = vdwg.mxu0
  %1809 = vmatprep.subr.bf16.mxu0 %v1246
  %1810 = vmatpush1.bf16.msra.mxu0 %v1245
  %1811 = vmatprep.subr.bf16.mxu0 %v1230
  %1812 = vmatpush1.bf16.msra.mxu0 %v1229
  %1813 = vmatprep.subr.bf16.mxu0 %v1214
  %1814 = vmatpush1.bf16.msra.mxu0 %v1213
  %1815 = vmatprep.subr.bf16.mxu0 %v1198
  %1816 = vmatpush1.bf16.msra.mxu0 %v1197
  %1817 = vmatprep.subr.bf16.mxu0 %v1182
  %1818 = vmatpush1.bf16.msra.mxu0 %v1181
  %1819 = vmatprep.subr.bf16.mxu0 %v1166
  %1820 = vmatpush1.bf16.msra.mxu0 %v1165
  %1821 = vmatprep.subr.bf16.mxu0 %v1150
  %1822 = vmatpush1.bf16.msra.mxu0 %v1149
  %1823 = vmatprep.subr.bf16.mxu0 %v1134
  %1824 = vmatpush1.bf16.msra.mxu0 %v1133
  %1825 = vmatprep.subr.bf16.mxu0 %v1374
  %1826 = vmatpush2.bf16.msra.mxu0 %v1373
  %1827 = vmatprep.subr.bf16.mxu0 %v1358
  %1828 = vmatpush2.bf16.msra.mxu0 %v1357
  %1829 = vmatprep.subr.bf16.mxu0 %v1342
  %1830 = vmatpush2.bf16.msra.mxu0 %v1341
  %1831 = vmatprep.subr.bf16.mxu0 %v1326
  %1832 = vmatpush2.bf16.msra.mxu0 %v1325
  %1833 = vmatprep.subr.bf16.mxu0 %v1310
  %1834 = vmatpush2.bf16.msra.mxu0 %v1309
  %1835 = vmatprep.subr.bf16.mxu0 %v1294
  %1836 = vmatpush2.bf16.msra.mxu0 %v1293
  %1837 = vmatprep.subr.bf16.mxu0 %v1278
  %1838 = vmatpush2.bf16.msra.mxu0 %v1277
  %1839 = vmatprep.subr.bf16.mxu0 %v1262
  %1840 = vmatpush2.bf16.msra.mxu0 %v1261
  %1841 = vmatprep.mubr.bf16.mxu0 %v354
  %1842 = vmatmul.mubr.bf16.gmra.mxu0 %v353
  %v1843 = vpop.f32.mrf.mxu0
  %v1844 = vadd.f32 0.0, %v1843
  %v1845 = vpop.f32.mrf.mxu0
  %v1846 = vadd.f32 0.0, %v1845
  %v1847 = vpop.f32.mrf.mxu0
  %v1848 = vadd.f32 0.0, %v1847
  %v1849 = vpop.f32.mrf.mxu0
  %v1850 = vadd.f32 0.0, %v1849
  %1851 = vdwg.mxu0
  %1852 = vmatprep.subr.bf16.mxu0 %v1248
  %1853 = vmatpush1.bf16.msra.mxu0 %v1247
  %1854 = vmatprep.subr.bf16.mxu0 %v1232
  %1855 = vmatpush1.bf16.msra.mxu0 %v1231
  %1856 = vmatprep.subr.bf16.mxu0 %v1216
  %1857 = vmatpush1.bf16.msra.mxu0 %v1215
  %1858 = vmatprep.subr.bf16.mxu0 %v1200
  %1859 = vmatpush1.bf16.msra.mxu0 %v1199
  %1860 = vmatprep.subr.bf16.mxu0 %v1184
  %1861 = vmatpush1.bf16.msra.mxu0 %v1183
  %1862 = vmatprep.subr.bf16.mxu0 %v1168
  %1863 = vmatpush1.bf16.msra.mxu0 %v1167
  %1864 = vmatprep.subr.bf16.mxu0 %v1152
  %1865 = vmatpush1.bf16.msra.mxu0 %v1151
  %1866 = vmatprep.subr.bf16.mxu0 %v1136
  %1867 = vmatpush1.bf16.msra.mxu0 %v1135
  %1868 = vmatprep.subr.bf16.mxu0 %v1376
  %1869 = vmatpush2.bf16.msra.mxu0 %v1375
  %1870 = vmatprep.subr.bf16.mxu0 %v1360
  %1871 = vmatpush2.bf16.msra.mxu0 %v1359
  %1872 = vmatprep.subr.bf16.mxu0 %v1344
  %1873 = vmatpush2.bf16.msra.mxu0 %v1343
  %1874 = vmatprep.subr.bf16.mxu0 %v1328
  %1875 = vmatpush2.bf16.msra.mxu0 %v1327
  %1876 = vmatprep.subr.bf16.mxu0 %v1312
  %1877 = vmatpush2.bf16.msra.mxu0 %v1311
  %1878 = vmatprep.subr.bf16.mxu0 %v1296
  %1879 = vmatpush2.bf16.msra.mxu0 %v1295
  %1880 = vmatprep.subr.bf16.mxu0 %v1280
  %1881 = vmatpush2.bf16.msra.mxu0 %v1279
  %1882 = vmatprep.subr.bf16.mxu0 %v1264
  %1883 = vmatpush2.bf16.msra.mxu0 %v1263
  %1884 = vmatprep.mubr.bf16.mxu0 %v354
  %1885 = vmatmul.mubr.bf16.gmra.mxu0 %v353
  %v1886 = vpop.f32.mrf.mxu0
  %v1887 = vadd.f32 0.0, %v1886
  %v1888 = vpop.f32.mrf.mxu0
  %v1889 = vadd.f32 0.0, %v1888
  %v1890 = vpop.f32.mrf.mxu0
  %v1891 = vadd.f32 0.0, %v1890
  %v1892 = vpop.f32.mrf.mxu0
  %v1893 = vadd.f32 0.0, %v1892
  %1894 = vdwg.mxu0
  %1895 = vmatprep.subr.bf16.mxu0 %v1250
  %1896 = vmatpush1.bf16.msra.mxu0 %v1249
  %1897 = vmatprep.subr.bf16.mxu0 %v1234
  %1898 = vmatpush1.bf16.msra.mxu0 %v1233
  %1899 = vmatprep.subr.bf16.mxu0 %v1218
  %1900 = vmatpush1.bf16.msra.mxu0 %v1217
  %1901 = vmatprep.subr.bf16.mxu0 %v1202
  %1902 = vmatpush1.bf16.msra.mxu0 %v1201
  %1903 = vmatprep.subr.bf16.mxu0 %v1186
  %1904 = vmatpush1.bf16.msra.mxu0 %v1185
  %1905 = vmatprep.subr.bf16.mxu0 %v1170
  %1906 = vmatpush1.bf16.msra.mxu0 %v1169
  %1907 = vmatprep.subr.bf16.mxu0 %v1154
  %1908 = vmatpush1.bf16.msra.mxu0 %v1153
  %1909 = vmatprep.subr.bf16.mxu0 %v1138
  %1910 = vmatpush1.bf16.msra.mxu0 %v1137
  %1911 = vmatprep.subr.bf16.mxu0 %v1378
  %1912 = vmatpush2.bf16.msra.mxu0 %v1377
  %1913 = vmatprep.subr.bf16.mxu0 %v1362
  %1914 = vmatpush2.bf16.msra.mxu0 %v1361
  %1915 = vmatprep.subr.bf16.mxu0 %v1346
  %1916 = vmatpush2.bf16.msra.mxu0 %v1345
  %1917 = vmatprep.subr.bf16.mxu0 %v1330
  %1918 = vmatpush2.bf16.msra.mxu0 %v1329
  %1919 = vmatprep.subr.bf16.mxu0 %v1314
  %1920 = vmatpush2.bf16.msra.mxu0 %v1313
  %1921 = vmatprep.subr.bf16.mxu0 %v1298
  %1922 = vmatpush2.bf16.msra.mxu0 %v1297
  %1923 = vmatprep.subr.bf16.mxu0 %v1282
  %1924 = vmatpush2.bf16.msra.mxu0 %v1281
  %1925 = vmatprep.subr.bf16.mxu0 %v1266
  %1926 = vmatpush2.bf16.msra.mxu0 %v1265
  %1927 = vmatprep.mubr.bf16.mxu0 %v354
  %1928 = vmatmul.mubr.bf16.gmra.mxu0 %v353
  %v1929 = vpop.f32.mrf.mxu0
  %v1930 = vadd.f32 0.0, %v1929
  %v1931 = vpop.f32.mrf.mxu0
  %v1932 = vadd.f32 0.0, %v1931
  %v1933 = vpop.f32.mrf.mxu0
  %v1934 = vadd.f32 0.0, %v1933
  %v1935 = vpop.f32.mrf.mxu0
  %v1936 = vadd.f32 0.0, %v1935
  %1937 = vdwg.mxu0
  %1938 = vmatprep.subr.bf16.mxu0 %v1252
  %1939 = vmatpush1.bf16.msra.mxu0 %v1251
  %1940 = vmatprep.subr.bf16.mxu0 %v1236
  %1941 = vmatpush1.bf16.msra.mxu0 %v1235
  %1942 = vmatprep.subr.bf16.mxu0 %v1220
  %1943 = vmatpush1.bf16.msra.mxu0 %v1219
  %1944 = vmatprep.subr.bf16.mxu0 %v1204
  %1945 = vmatpush1.bf16.msra.mxu0 %v1203
  %1946 = vmatprep.subr.bf16.mxu0 %v1188
  %1947 = vmatpush1.bf16.msra.mxu0 %v1187
  %1948 = vmatprep.subr.bf16.mxu0 %v1172
  %1949 = vmatpush1.bf16.msra.mxu0 %v1171
  %1950 = vmatprep.subr.bf16.mxu0 %v1156
  %1951 = vmatpush1.bf16.msra.mxu0 %v1155
  %1952 = vmatprep.subr.bf16.mxu0 %v1140
  %1953 = vmatpush1.bf16.msra.mxu0 %v1139
  %1954 = vmatprep.subr.bf16.mxu0 %v1380
  %1955 = vmatpush2.bf16.msra.mxu0 %v1379
  %1956 = vmatprep.subr.bf16.mxu0 %v1364
  %1957 = vmatpush2.bf16.msra.mxu0 %v1363
  %1958 = vmatprep.subr.bf16.mxu0 %v1348
  %1959 = vmatpush2.bf16.msra.mxu0 %v1347
  %1960 = vmatprep.subr.bf16.mxu0 %v1332
  %1961 = vmatpush2.bf16.msra.mxu0 %v1331
  %1962 = vmatprep.subr.bf16.mxu0 %v1316
  %1963 = vmatpush2.bf16.msra.mxu0 %v1315
  %1964 = vmatprep.subr.bf16.mxu0 %v1300
  %1965 = vmatpush2.bf16.msra.mxu0 %v1299
  %1966 = vmatprep.subr.bf16.mxu0 %v1284
  %1967 = vmatpush2.bf16.msra.mxu0 %v1283
  %1968 = vmatprep.subr.bf16.mxu0 %v1268
  %1969 = vmatpush2.bf16.msra.mxu0 %v1267
  %1970 = vmatprep.mubr.bf16.mxu0 %v354
  %1971 = vmatmul.mubr.bf16.gmra.mxu0 %v353
  %v1972 = vpop.f32.mrf.mxu0
  %v1973 = vadd.f32 0.0, %v1972
  %v1974 = vpop.f32.mrf.mxu0
  %v1975 = vadd.f32 0.0, %v1974
  %v1976 = vpop.f32.mrf.mxu0
  %v1977 = vadd.f32 0.0, %v1976
  %v1978 = vpop.f32.mrf.mxu0
  %v1979 = vadd.f32 0.0, %v1978
  %1980 = vdwg.mxu0
  %v1981 = vadd.f32 %v57, %v1672
  %v1982 = vadd.f32 %v58, %v1674
  %v1983 = vadd.f32 %v59, %v1715
  %v1984 = vadd.f32 %v60, %v1717
  %v1985 = vadd.f32 %v61, %v1758
  %v1986 = vadd.f32 %v62, %v1760
  %v1987 = vadd.f32 %v63, %v1801
  %v1988 = vadd.f32 %v64, %v1803
  %v1989 = vadd.f32 %v65, %v1844
  %v1990 = vadd.f32 %v66, %v1846
  %v1991 = vadd.f32 %v67, %v1887
  %v1992 = vadd.f32 %v68, %v1889
  %v1993 = vadd.f32 %v69, %v1930
  %v1994 = vadd.f32 %v70, %v1932
  %v1995 = vadd.f32 %v71, %v1973
  %v1996 = vadd.f32 %v72, %v1975
  %v1997 = vadd.f32 %v73, %v1676
  %v1998 = vadd.f32 %v74, %v1678
  %v1999 = vadd.f32 %v75, %v1719
  %v2000 = vadd.f32 %v76, %v1721
  %v2001 = vadd.f32 %v77, %v1762
  %v2002 = vadd.f32 %v78, %v1764
  %v2003 = vadd.f32 %v79, %v1805
  %v2004 = vadd.f32 %v80, %v1807
  %v2005 = vadd.f32 %v81, %v1848
  %v2006 = vadd.f32 %v82, %v1850
  %v2007 = vadd.f32 %v83, %v1891
  %v2008 = vadd.f32 %v84, %v1893
  %v2009 = vadd.f32 %v85, %v1934
  %v2010 = vadd.f32 %v86, %v1936
  %v2011 = vadd.f32 %v87, %v1977
  %v2012 = vadd.f32 %v88, %v1979
  %2013 = vst [vmem:[#allocation2] sm:$0xff] %v1981
  %2014 = vst [vmem:[#allocation2 + $0x8] sm:$0xff] %v1982
  %2015 = vst [vmem:[#allocation2 + $0x10] sm:$0xff] %v1983
  %2016 = vst [vmem:[#allocation2 + $0x18] sm:$0xff] %v1984
  %2017 = vst [vmem:[#allocation2 + $0x20] sm:$0xff] %v1985
  %2018 = vst [vmem:[#allocation2 + $0x28] sm:$0xff] %v1986
  %2019 = vst [vmem:[#allocation2 + $0x30] sm:$0xff] %v1987
  %2020 = vst [vmem:[#allocation2 + $0x38] sm:$0xff] %v1988
  %2021 = vst [vmem:[#allocation2 + $0x40] sm:$0xff] %v1989
  %2022 = vst [vmem:[#allocation2 + $0x48] sm:$0xff] %v1990
  %2023 = vst [vmem:[#allocation2 + $0x50] sm:$0xff] %v1991
  %2024 = vst [vmem:[#allocation2 + $0x58] sm:$0xff] %v1992
  %2025 = vst [vmem:[#allocation2 + $0x60] sm:$0xff] %v1993
  %2026 = vst [vmem:[#allocation2 + $0x68] sm:$0xff] %v1994
  %2027 = vst [vmem:[#allocation2 + $0x70] sm:$0xff] %v1995
  %2028 = vst [vmem:[#allocation2 + $0x78] sm:$0xff] %v1996
  %2029 = vst [vmem:[#allocation2 + $0x80] sm:$0xff] %v1997
  %2030 = vst [vmem:[#allocation2 + $0x88] sm:$0xff] %v1998
  %2031 = vst [vmem:[#allocation2 + $0x90] sm:$0xff] %v1999
  %2032 = vst [vmem:[#allocation2 + $0x98] sm:$0xff] %v2000
  %2033 = vst [vmem:[#allocation2 + $0xa0] sm:$0xff] %v2001
  %2034 = vst [vmem:[#allocation2 + $0xa8] sm:$0xff] %v2002
  %2035 = vst [vmem:[#allocation2 + $0xb0] sm:$0xff] %v2003
  %2036 = vst [vmem:[#allocation2 + $0xb8] sm:$0xff] %v2004
  %2037 = vst [vmem:[#allocation2 + $0xc0] sm:$0xff] %v2005
  %2038 = vst [vmem:[#allocation2 + $0xc8] sm:$0xff] %v2006
  %2039 = vst [vmem:[#allocation2 + $0xd0] sm:$0xff] %v2007
  %2040 = vst [vmem:[#allocation2 + $0xd8] sm:$0xff] %v2008
  %2041 = vst [vmem:[#allocation2 + $0xe0] sm:$0xff] %v2009
  %2042 = vst [vmem:[#allocation2 + $0xe8] sm:$0xff] %v2010
  %2043 = vst [vmem:[#allocation2 + $0xf0] sm:$0xff] %v2011
  %2044 = vst [vmem:[#allocation2 + $0xf8] sm:$0xff] %v2012
  // Predicated region
  $region26: #{encoder_projector_dual_concat.1} parent=0 // pred_check
    %p2045 = pneg %p21
  $region27: #{encoder_projector_dual_concat.1} parent=0 // pred_check_branch
    %2047 = sbr.rel (%p2045) target = $region29
  $region28: #{encoder_projector_dual_concat.1} parent=0 // pred_region
    %v2048 = vld [vmem:[#allocation2] sm:$0xff]
    %v2049 = vld [vmem:[#allocation2 + $0x8] sm:$0xff]
    %v2050 = vld [vmem:[#allocation2 + $0x10] sm:$0xff]
    %v2051 = vld [vmem:[#allocation2 + $0x18] sm:$0xff]
    %v2052 = vld [vmem:[#allocation2 + $0x20] sm:$0xff]
    %v2053 = vld [vmem:[#allocation2 + $0x28] sm:$0xff]
    %v2054 = vld [vmem:[#allocation2 + $0x30] sm:$0xff]
    %v2055 = vld [vmem:[#allocation2 + $0x38] sm:$0xff]
    %v2056 = vld [vmem:[#allocation2 + $0x40] sm:$0xff]
    %v2057 = vld [vmem:[#allocation2 + $0x48] sm:$0xff]
    %v2058 = vld [vmem:[#allocation2 + $0x50] sm:$0xff]
    %v2059 = vld [vmem:[#allocation2 + $0x58] sm:$0xff]
    %v2060 = vld [vmem:[#allocation2 + $0x60] sm:$0xff]
    %v2061 = vld [vmem:[#allocation2 + $0x68] sm:$0xff]
    %v2062 = vld [vmem:[#allocation2 + $0x70] sm:$0xff]
    %v2063 = vld [vmem:[#allocation2 + $0x78] sm:$0xff]
    %v2064 = vld [vmem:[#allocation2 + $0x80] sm:$0xff]
    %v2065 = vld [vmem:[#allocation2 + $0x88] sm:$0xff]
    %v2066 = vld [vmem:[#allocation2 + $0x90] sm:$0xff]
    %v2067 = vld [vmem:[#allocation2 + $0x98] sm:$0xff]
    %v2068 = vld [vmem:[#allocation2 + $0xa0] sm:$0xff]
    %v2069 = vld [vmem:[#allocation2 + $0xa8] sm:$0xff]
    %v2070 = vld [vmem:[#allocation2 + $0xb0] sm:$0xff]
    %v2071 = vld [vmem:[#allocation2 + $0xb8] sm:$0xff]
    %v2072 = vld [vmem:[#allocation2 + $0xc0] sm:$0xff]
    %v2073 = vld [vmem:[#allocation2 + $0xc8] sm:$0xff]
    %v2074 = vld [vmem:[#allocation2 + $0xd0] sm:$0xff]
    %v2075 = vld [vmem:[#allocation2 + $0xd8] sm:$0xff]
    %v2076 = vld [vmem:[#allocation2 + $0xe0] sm:$0xff]
    %v2077 = vld [vmem:[#allocation2 + $0xe8] sm:$0xff]
    %v2078 = vld [vmem:[#allocation2 + $0xf0] sm:$0xff]
    %v2079 = vld [vmem:[#allocation2 + $0xf8] sm:$0xff]
    %v2080 = vld [vmem:[%s2] sm:$0xff]
    %v2081 = vld [vmem:[%s2 + $0x8] sm:$0xff]
    %v2084 = vlaneseq
    %v2085 = vshrl.u32 %v2084, 7
    %v2086 = vsub.s32 0, %v2085
    %v2087 = vrot.slane %v2080, %v2086
    %v2088 = vlaneseq
    %v2089 = vshrl.u32 %v2088, 7
    %v2090 = vsub.s32 1, %v2089
    %v2091 = vrot.slane %v2080, %v2090
    %v2092 = vlaneseq
    %v2093 = vshrl.u32 %v2092, 7
    %v2094 = vsub.s32 2, %v2093
    %v2095 = vrot.slane %v2080, %v2094
    %v2096 = vlaneseq
    %v2097 = vshrl.u32 %v2096, 7
    %v2098 = vsub.s32 3, %v2097
    %v2099 = vrot.slane %v2080, %v2098
    %v2100 = vlaneseq
    %v2101 = vshrl.u32 %v2100, 7
    %v2102 = vsub.s32 4, %v2101
    %v2103 = vrot.slane %v2080, %v2102
    %v2104 = vlaneseq
    %v2105 = vshrl.u32 %v2104, 7
    %v2106 = vsub.s32 5, %v2105
    %v2107 = vrot.slane %v2080, %v2106
    %v2108 = vlaneseq
    %v2109 = vshrl.u32 %v2108, 7
    %v2110 = vsub.s32 6, %v2109
    %v2111 = vrot.slane %v2080, %v2110
    %v2112 = vlaneseq
    %v2113 = vshrl.u32 %v2112, 7
    %v2114 = vsub.s32 7, %v2113
    %v2115 = vrot.slane %v2080, %v2114
    %v2116 = vlaneseq
    %v2117 = vshrl.u32 %v2116, 7
    %v2118 = vsub.s32 0, %v2117
    %v2119 = vrot.slane %v2081, %v2118
    %v2120 = vlaneseq
    %v2121 = vshrl.u32 %v2120, 7
    %v2122 = vsub.s32 1, %v2121
    %v2123 = vrot.slane %v2081, %v2122
    %v2124 = vlaneseq
    %v2125 = vshrl.u32 %v2124, 7
    %v2126 = vsub.s32 2, %v2125
    %v2127 = vrot.slane %v2081, %v2126
    %v2128 = vlaneseq
    %v2129 = vshrl.u32 %v2128, 7
    %v2130 = vsub.s32 3, %v2129
    %v2131 = vrot.slane %v2081, %v2130
    %v2132 = vlaneseq
    %v2133 = vshrl.u32 %v2132, 7
    %v2134 = vsub.s32 4, %v2133
    %v2135 = vrot.slane %v2081, %v2134
    %v2136 = vlaneseq
    %v2137 = vshrl.u32 %v2136, 7
    %v2138 = vsub.s32 5, %v2137
    %v2139 = vrot.slane %v2081, %v2138
    %v2140 = vlaneseq
    %v2141 = vshrl.u32 %v2140, 7
    %v2142 = vsub.s32 6, %v2141
    %v2143 = vrot.slane %v2081, %v2142
    %v2144 = vlaneseq
    %v2145 = vshrl.u32 %v2144, 7
    %v2146 = vsub.s32 7, %v2145
    %v2147 = vrot.slane %v2081, %v2146
    %v2164 = vadd.f32 %v2048, %v2087
    %v2165 = vadd.f32 %v2049, %v2091
    %v2166 = vadd.f32 %v2050, %v2095
    %v2167 = vadd.f32 %v2051, %v2099
    %v2168 = vadd.f32 %v2052, %v2103
    %v2169 = vadd.f32 %v2053, %v2107
    %v2170 = vadd.f32 %v2054, %v2111
    %v2171 = vadd.f32 %v2055, %v2115
    %v2172 = vadd.f32 %v2056, %v2119
    %v2173 = vadd.f32 %v2057, %v2123
    %v2174 = vadd.f32 %v2058, %v2127
    %v2175 = vadd.f32 %v2059, %v2131
    %v2176 = vadd.f32 %v2060, %v2135
    %v2177 = vadd.f32 %v2061, %v2139
    %v2178 = vadd.f32 %v2062, %v2143
    %v2179 = vadd.f32 %v2063, %v2147
    %v2180 = vadd.f32 %v2064, %v2087
    %v2181 = vadd.f32 %v2065, %v2091
    %v2182 = vadd.f32 %v2066, %v2095
    %v2183 = vadd.f32 %v2067, %v2099
    %v2184 = vadd.f32 %v2068, %v2103
    %v2185 = vadd.f32 %v2069, %v2107
    %v2186 = vadd.f32 %v2070, %v2111
    %v2187 = vadd.f32 %v2071, %v2115
    %v2188 = vadd.f32 %v2072, %v2119
    %v2189 = vadd.f32 %v2073, %v2123
    %v2190 = vadd.f32 %v2074, %v2127
    %v2191 = vadd.f32 %v2075, %v2131
    %v2192 = vadd.f32 %v2076, %v2135
    %v2193 = vadd.f32 %v2077, %v2139
    %v2194 = vadd.f32 %v2078, %v2143
    %v2195 = vadd.f32 %v2079, %v2147
    %v2196 = vmax.f32 %v2164, 0.0
    %v2197 = vmax.f32 %v2165, 0.0
    %v2198 = vmax.f32 %v2166, 0.0
    %v2199 = vmax.f32 %v2167, 0.0
    %v2200 = vmax.f32 %v2168, 0.0
    %v2201 = vmax.f32 %v2169, 0.0
    %v2202 = vmax.f32 %v2170, 0.0
    %v2203 = vmax.f32 %v2171, 0.0
    %v2204 = vmax.f32 %v2172, 0.0
    %v2205 = vmax.f32 %v2173, 0.0
    %v2206 = vmax.f32 %v2174, 0.0
    %v2207 = vmax.f32 %v2175, 0.0
    %v2208 = vmax.f32 %v2176, 0.0
    %v2209 = vmax.f32 %v2177, 0.0
    %v2210 = vmax.f32 %v2178, 0.0
    %v2211 = vmax.f32 %v2179, 0.0
    %v2212 = vmax.f32 %v2180, 0.0
    %v2213 = vmax.f32 %v2181, 0.0
    %v2214 = vmax.f32 %v2182, 0.0
    %v2215 = vmax.f32 %v2183, 0.0
    %v2216 = vmax.f32 %v2184, 0.0
    %v2217 = vmax.f32 %v2185, 0.0
    %v2218 = vmax.f32 %v2186, 0.0
    %v2219 = vmax.f32 %v2187, 0.0
    %v2220 = vmax.f32 %v2188, 0.0
    %v2221 = vmax.f32 %v2189, 0.0
    %v2222 = vmax.f32 %v2190, 0.0
    %v2223 = vmax.f32 %v2191, 0.0
    %v2224 = vmax.f32 %v2192, 0.0
    %v2225 = vmax.f32 %v2193, 0.0
    %v2226 = vmax.f32 %v2194, 0.0
    %v2227 = vmax.f32 %v2195, 0.0
    %v2228 = vpack.c.bf16 %v2212, %v2196
    %v2229 = vpack.c.bf16 %v2213, %v2197
    %v2230 = vpack.c.bf16 %v2214, %v2198
    %v2231 = vpack.c.bf16 %v2215, %v2199
    %v2232 = vpack.c.bf16 %v2216, %v2200
    %v2233 = vpack.c.bf16 %v2217, %v2201
    %v2234 = vpack.c.bf16 %v2218, %v2202
    %v2235 = vpack.c.bf16 %v2219, %v2203
    %v2236 = vpack.c.bf16 %v2220, %v2204
    %v2237 = vpack.c.bf16 %v2221, %v2205
    %v2238 = vpack.c.bf16 %v2222, %v2206
    %v2239 = vpack.c.bf16 %v2223, %v2207
    %v2240 = vpack.c.bf16 %v2224, %v2208
    %v2241 = vpack.c.bf16 %v2225, %v2209
    %v2242 = vpack.c.bf16 %v2226, %v2210
    %v2243 = vpack.c.bf16 %v2227, %v2211
    %v2244 = vld [vmem:[%s3] sm:$0xf]
    %v2245 = vld [vmem:[%s3 + $0x4] sm:$0xf]
    %v2246 = vld [vmem:[%s3 + $0x8] sm:$0xf]
    %v2247 = vld [vmem:[%s3 + $0xc] sm:$0xf]
    %v2248 = vld [vmem:[%s3 + $0x10] sm:$0xf]
    %v2249 = vld [vmem:[%s3 + $0x14] sm:$0xf]
    %v2250 = vld [vmem:[%s3 + $0x18] sm:$0xf]
    %v2251 = vld [vmem:[%s3 + $0x1c] sm:$0xf]
    %v2252 = vld [vmem:[%s3 + $0x20] sm:$0xf]
    %v2253 = vld [vmem:[%s3 + $0x24] sm:$0xf]
    %v2254 = vld [vmem:[%s3 + $0x28] sm:$0xf]
    %v2255 = vld [vmem:[%s3 + $0x2c] sm:$0xf]
    %v2256 = vld [vmem:[%s3 + $0x30] sm:$0xf]
    %v2257 = vld [vmem:[%s3 + $0x34] sm:$0xf]
    %v2258 = vld [vmem:[%s3 + $0x38] sm:$0xf]
    %v2259 = vld [vmem:[%s3 + $0x3c] sm:$0xf]
    %v2260 = vld [vmem:[%s3 + $0x40] sm:$0xf]
    %v2261 = vld [vmem:[%s3 + $0x44] sm:$0xf]
    %v2262 = vld [vmem:[%s3 + $0x48] sm:$0xf]
    %v2263 = vld [vmem:[%s3 + $0x4c] sm:$0xf]
    %v2264 = vld [vmem:[%s3 + $0x50] sm:$0xf]
    %v2265 = vld [vmem:[%s3 + $0x54] sm:$0xf]
    %v2266 = vld [vmem:[%s3 + $0x58] sm:$0xf]
    %v2267 = vld [vmem:[%s3 + $0x5c] sm:$0xf]
    %v2268 = vld [vmem:[%s3 + $0x60] sm:$0xf]
    %v2269 = vld [vmem:[%s3 + $0x64] sm:$0xf]
    %v2270 = vld [vmem:[%s3 + $0x68] sm:$0xf]
    %v2271 = vld [vmem:[%s3 + $0x6c] sm:$0xf]
    %v2272 = vld [vmem:[%s3 + $0x70] sm:$0xf]
    %v2273 = vld [vmem:[%s3 + $0x74] sm:$0xf]
    %v2274 = vld [vmem:[%s3 + $0x78] sm:$0xf]
    %v2275 = vld [vmem:[%s3 + $0x7c] sm:$0xf]
    %v2276 = vld [vmem:[%s3 + $0x80] sm:$0xf]
    %v2277 = vld [vmem:[%s3 + $0x84] sm:$0xf]
    %v2278 = vld [vmem:[%s3 + $0x88] sm:$0xf]
    %v2279 = vld [vmem:[%s3 + $0x8c] sm:$0xf]
    %v2280 = vld [vmem:[%s3 + $0x90] sm:$0xf]
    %v2281 = vld [vmem:[%s3 + $0x94] sm:$0xf]
    %v2282 = vld [vmem:[%s3 + $0x98] sm:$0xf]
    %v2283 = vld [vmem:[%s3 + $0x9c] sm:$0xf]
    %v2284 = vld [vmem:[%s3 + $0xa0] sm:$0xf]
    %v2285 = vld [vmem:[%s3 + $0xa4] sm:$0xf]
    %v2286 = vld [vmem:[%s3 + $0xa8] sm:$0xf]
    %v2287 = vld [vmem:[%s3 + $0xac] sm:$0xf]
    %v2288 = vld [vmem:[%s3 + $0xb0] sm:$0xf]
    %v2289 = vld [vmem:[%s3 + $0xb4] sm:$0xf]
    %v2290 = vld [vmem:[%s3 + $0xb8] sm:$0xf]
    %v2291 = vld [vmem:[%s3 + $0xbc] sm:$0xf]
    %v2292 = vld [vmem:[%s3 + $0xc0] sm:$0xf]
    %v2293 = vld [vmem:[%s3 + $0xc4] sm:$0xf]
    %v2294 = vld [vmem:[%s3 + $0xc8] sm:$0xf]
    %v2295 = vld [vmem:[%s3 + $0xcc] sm:$0xf]
    %v2296 = vld [vmem:[%s3 + $0xd0] sm:$0xf]
    %v2297 = vld [vmem:[%s3 + $0xd4] sm:$0xf]
    %v2298 = vld [vmem:[%s3 + $0xd8] sm:$0xf]
    %v2299 = vld [vmem:[%s3 + $0xdc] sm:$0xf]
    %v2300 = vld [vmem:[%s3 + $0xe0] sm:$0xf]
    %v2301 = vld [vmem:[%s3 + $0xe4] sm:$0xf]
    %v2302 = vld [vmem:[%s3 + $0xe8] sm:$0xf]
    %v2303 = vld [vmem:[%s3 + $0xec] sm:$0xf]
    %v2304 = vld [vmem:[%s3 + $0xf0] sm:$0xf]
    %v2305 = vld [vmem:[%s3 + $0xf4] sm:$0xf]
    %v2306 = vld [vmem:[%s3 + $0xf8] sm:$0xf]
    %v2307 = vld [vmem:[%s3 + $0xfc] sm:$0xf]
    %v2308 = vld [vmem:[%s3 + $0x100] sm:$0xf]
    %v2309 = vld [vmem:[%s3 + $0x104] sm:$0xf]
    %v2310 = vld [vmem:[%s3 + $0x108] sm:$0xf]
    %v2311 = vld [vmem:[%s3 + $0x10c] sm:$0xf]
    %v2312 = vld [vmem:[%s3 + $0x110] sm:$0xf]
    %v2313 = vld [vmem:[%s3 + $0x114] sm:$0xf]
    %v2314 = vld [vmem:[%s3 + $0x118] sm:$0xf]
    %v2315 = vld [vmem:[%s3 + $0x11c] sm:$0xf]
    %v2316 = vld [vmem:[%s3 + $0x120] sm:$0xf]
    %v2317 = vld [vmem:[%s3 + $0x124] sm:$0xf]
    %v2318 = vld [vmem:[%s3 + $0x128] sm:$0xf]
    %v2319 = vld [vmem:[%s3 + $0x12c] sm:$0xf]
    %v2320 = vld [vmem:[%s3 + $0x130] sm:$0xf]
    %v2321 = vld [vmem:[%s3 + $0x134] sm:$0xf]
    %v2322 = vld [vmem:[%s3 + $0x138] sm:$0xf]
    %v2323 = vld [vmem:[%s3 + $0x13c] sm:$0xf]
    %v2324 = vld [vmem:[%s3 + $0x140] sm:$0xf]
    %v2325 = vld [vmem:[%s3 + $0x144] sm:$0xf]
    %v2326 = vld [vmem:[%s3 + $0x148] sm:$0xf]
    %v2327 = vld [vmem:[%s3 + $0x14c] sm:$0xf]
    %v2328 = vld [vmem:[%s3 + $0x150] sm:$0xf]
    %v2329 = vld [vmem:[%s3 + $0x154] sm:$0xf]
    %v2330 = vld [vmem:[%s3 + $0x158] sm:$0xf]
    %v2331 = vld [vmem:[%s3 + $0x15c] sm:$0xf]
    %v2332 = vld [vmem:[%s3 + $0x160] sm:$0xf]
    %v2333 = vld [vmem:[%s3 + $0x164] sm:$0xf]
    %v2334 = vld [vmem:[%s3 + $0x168] sm:$0xf]
    %v2335 = vld [vmem:[%s3 + $0x16c] sm:$0xf]
    %v2336 = vld [vmem:[%s3 + $0x170] sm:$0xf]
    %v2337 = vld [vmem:[%s3 + $0x174] sm:$0xf]
    %v2338 = vld [vmem:[%s3 + $0x178] sm:$0xf]
    %v2339 = vld [vmem:[%s3 + $0x17c] sm:$0xf]
    %v2340 = vld [vmem:[%s3 + $0x180] sm:$0xf]
    %v2341 = vld [vmem:[%s3 + $0x184] sm:$0xf]
    %v2342 = vld [vmem:[%s3 + $0x188] sm:$0xf]
    %v2343 = vld [vmem:[%s3 + $0x18c] sm:$0xf]
    %v2344 = vld [vmem:[%s3 + $0x190] sm:$0xf]
    %v2345 = vld [vmem:[%s3 + $0x194] sm:$0xf]
    %v2346 = vld [vmem:[%s3 + $0x198] sm:$0xf]
    %v2347 = vld [vmem:[%s3 + $0x19c] sm:$0xf]
    %v2348 = vld [vmem:[%s3 + $0x1a0] sm:$0xf]
    %v2349 = vld [vmem:[%s3 + $0x1a4] sm:$0xf]
    %v2350 = vld [vmem:[%s3 + $0x1a8] sm:$0xf]
    %v2351 = vld [vmem:[%s3 + $0x1ac] sm:$0xf]
    %v2352 = vld [vmem:[%s3 + $0x1b0] sm:$0xf]
    %v2353 = vld [vmem:[%s3 + $0x1b4] sm:$0xf]
    %v2354 = vld [vmem:[%s3 + $0x1b8] sm:$0xf]
    %v2355 = vld [vmem:[%s3 + $0x1bc] sm:$0xf]
    %v2356 = vld [vmem:[%s3 + $0x1c0] sm:$0xf]
    %v2357 = vld [vmem:[%s3 + $0x1c4] sm:$0xf]
    %v2358 = vld [vmem:[%s3 + $0x1c8] sm:$0xf]
    %v2359 = vld [vmem:[%s3 + $0x1cc] sm:$0xf]
    %v2360 = vld [vmem:[%s3 + $0x1d0] sm:$0xf]
    %v2361 = vld [vmem:[%s3 + $0x1d4] sm:$0xf]
    %v2362 = vld [vmem:[%s3 + $0x1d8] sm:$0xf]
    %v2363 = vld [vmem:[%s3 + $0x1dc] sm:$0xf]
    %v2364 = vld [vmem:[%s3 + $0x1e0] sm:$0xf]
    %v2365 = vld [vmem:[%s3 + $0x1e4] sm:$0xf]
    %v2366 = vld [vmem:[%s3 + $0x1e8] sm:$0xf]
    %v2367 = vld [vmem:[%s3 + $0x1ec] sm:$0xf]
    %v2368 = vld [vmem:[%s3 + $0x1f0] sm:$0xf]
    %v2369 = vld [vmem:[%s3 + $0x1f4] sm:$0xf]
    %v2370 = vld [vmem:[%s3 + $0x1f8] sm:$0xf]
    %v2371 = vld [vmem:[%s3 + $0x1fc] sm:$0xf]
    %v2372 = vld [vmem:[%s3 + $0x200] sm:$0xf]
    %v2373 = vld [vmem:[%s3 + $0x204] sm:$0xf]
    %v2374 = vld [vmem:[%s3 + $0x208] sm:$0xf]
    %v2375 = vld [vmem:[%s3 + $0x20c] sm:$0xf]
    %v2376 = vld [vmem:[%s3 + $0x210] sm:$0xf]
    %v2377 = vld [vmem:[%s3 + $0x214] sm:$0xf]
    %v2378 = vld [vmem:[%s3 + $0x218] sm:$0xf]
    %v2379 = vld [vmem:[%s3 + $0x21c] sm:$0xf]
    %v2380 = vld [vmem:[%s3 + $0x220] sm:$0xf]
    %v2381 = vld [vmem:[%s3 + $0x224] sm:$0xf]
    %v2382 = vld [vmem:[%s3 + $0x228] sm:$0xf]
    %v2383 = vld [vmem:[%s3 + $0x22c] sm:$0xf]
    %v2384 = vld [vmem:[%s3 + $0x230] sm:$0xf]
    %v2385 = vld [vmem:[%s3 + $0x234] sm:$0xf]
    %v2386 = vld [vmem:[%s3 + $0x238] sm:$0xf]
    %v2387 = vld [vmem:[%s3 + $0x23c] sm:$0xf]
    %v2388 = vld [vmem:[%s3 + $0x240] sm:$0xf]
    %v2389 = vld [vmem:[%s3 + $0x244] sm:$0xf]
    %v2390 = vld [vmem:[%s3 + $0x248] sm:$0xf]
    %v2391 = vld [vmem:[%s3 + $0x24c] sm:$0xf]
    %v2392 = vld [vmem:[%s3 + $0x250] sm:$0xf]
    %v2393 = vld [vmem:[%s3 + $0x254] sm:$0xf]
    %v2394 = vld [vmem:[%s3 + $0x258] sm:$0xf]
    %v2395 = vld [vmem:[%s3 + $0x25c] sm:$0xf]
    %v2396 = vld [vmem:[%s3 + $0x260] sm:$0xf]
    %v2397 = vld [vmem:[%s3 + $0x264] sm:$0xf]
    %v2398 = vld [vmem:[%s3 + $0x268] sm:$0xf]
    %v2399 = vld [vmem:[%s3 + $0x26c] sm:$0xf]
    %v2400 = vld [vmem:[%s3 + $0x270] sm:$0xf]
    %v2401 = vld [vmem:[%s3 + $0x274] sm:$0xf]
    %v2402 = vld [vmem:[%s3 + $0x278] sm:$0xf]
    %v2403 = vld [vmem:[%s3 + $0x27c] sm:$0xf]
    %v2404 = vld [vmem:[%s3 + $0x280] sm:$0xf]
    %v2405 = vld [vmem:[%s3 + $0x284] sm:$0xf]
    %v2406 = vld [vmem:[%s3 + $0x288] sm:$0xf]
    %v2407 = vld [vmem:[%s3 + $0x28c] sm:$0xf]
    %v2408 = vld [vmem:[%s3 + $0x290] sm:$0xf]
    %v2409 = vld [vmem:[%s3 + $0x294] sm:$0xf]
    %v2410 = vld [vmem:[%s3 + $0x298] sm:$0xf]
    %v2411 = vld [vmem:[%s3 + $0x29c] sm:$0xf]
    %v2412 = vld [vmem:[%s3 + $0x2a0] sm:$0xf]
    %v2413 = vld [vmem:[%s3 + $0x2a4] sm:$0xf]
    %v2414 = vld [vmem:[%s3 + $0x2a8] sm:$0xf]
    %v2415 = vld [vmem:[%s3 + $0x2ac] sm:$0xf]
    %v2416 = vld [vmem:[%s3 + $0x2b0] sm:$0xf]
    %v2417 = vld [vmem:[%s3 + $0x2b4] sm:$0xf]
    %v2418 = vld [vmem:[%s3 + $0x2b8] sm:$0xf]
    %v2419 = vld [vmem:[%s3 + $0x2bc] sm:$0xf]
    %v2420 = vld [vmem:[%s3 + $0x2c0] sm:$0xf]
    %v2421 = vld [vmem:[%s3 + $0x2c4] sm:$0xf]
    %v2422 = vld [vmem:[%s3 + $0x2c8] sm:$0xf]
    %v2423 = vld [vmem:[%s3 + $0x2cc] sm:$0xf]
    %v2424 = vld [vmem:[%s3 + $0x2d0] sm:$0xf]
    %v2425 = vld [vmem:[%s3 + $0x2d4] sm:$0xf]
    %v2426 = vld [vmem:[%s3 + $0x2d8] sm:$0xf]
    %v2427 = vld [vmem:[%s3 + $0x2dc] sm:$0xf]
    %v2428 = vld [vmem:[%s3 + $0x2e0] sm:$0xf]
    %v2429 = vld [vmem:[%s3 + $0x2e4] sm:$0xf]
    %v2430 = vld [vmem:[%s3 + $0x2e8] sm:$0xf]
    %v2431 = vld [vmem:[%s3 + $0x2ec] sm:$0xf]
    %v2432 = vld [vmem:[%s3 + $0x2f0] sm:$0xf]
    %v2433 = vld [vmem:[%s3 + $0x2f4] sm:$0xf]
    %v2434 = vld [vmem:[%s3 + $0x2f8] sm:$0xf]
    %v2435 = vld [vmem:[%s3 + $0x2fc] sm:$0xf]
    %v2436 = vld [vmem:[%s3 + $0x300] sm:$0xf]
    %v2437 = vld [vmem:[%s3 + $0x304] sm:$0xf]
    %v2438 = vld [vmem:[%s3 + $0x308] sm:$0xf]
    %v2439 = vld [vmem:[%s3 + $0x30c] sm:$0xf]
    %v2440 = vld [vmem:[%s3 + $0x310] sm:$0xf]
    %v2441 = vld [vmem:[%s3 + $0x314] sm:$0xf]
    %v2442 = vld [vmem:[%s3 + $0x318] sm:$0xf]
    %v2443 = vld [vmem:[%s3 + $0x31c] sm:$0xf]
    %v2444 = vld [vmem:[%s3 + $0x320] sm:$0xf]
    %v2445 = vld [vmem:[%s3 + $0x324] sm:$0xf]
    %v2446 = vld [vmem:[%s3 + $0x328] sm:$0xf]
    %v2447 = vld [vmem:[%s3 + $0x32c] sm:$0xf]
    %v2448 = vld [vmem:[%s3 + $0x330] sm:$0xf]
    %v2449 = vld [vmem:[%s3 + $0x334] sm:$0xf]
    %v2450 = vld [vmem:[%s3 + $0x338] sm:$0xf]
    %v2451 = vld [vmem:[%s3 + $0x33c] sm:$0xf]
    %v2452 = vld [vmem:[%s3 + $0x340] sm:$0xf]
    %v2453 = vld [vmem:[%s3 + $0x344] sm:$0xf]
    %v2454 = vld [vmem:[%s3 + $0x348] sm:$0xf]
    %v2455 = vld [vmem:[%s3 + $0x34c] sm:$0xf]
    %v2456 = vld [vmem:[%s3 + $0x350] sm:$0xf]
    %v2457 = vld [vmem:[%s3 + $0x354] sm:$0xf]
    %v2458 = vld [vmem:[%s3 + $0x358] sm:$0xf]
    %v2459 = vld [vmem:[%s3 + $0x35c] sm:$0xf]
    %v2460 = vld [vmem:[%s3 + $0x360] sm:$0xf]
    %v2461 = vld [vmem:[%s3 + $0x364] sm:$0xf]
    %v2462 = vld [vmem:[%s3 + $0x368] sm:$0xf]
    %v2463 = vld [vmem:[%s3 + $0x36c] sm:$0xf]
    %v2464 = vld [vmem:[%s3 + $0x370] sm:$0xf]
    %v2465 = vld [vmem:[%s3 + $0x374] sm:$0xf]
    %v2466 = vld [vmem:[%s3 + $0x378] sm:$0xf]
    %v2467 = vld [vmem:[%s3 + $0x37c] sm:$0xf]
    %v2468 = vld [vmem:[%s3 + $0x380] sm:$0xf]
    %v2469 = vld [vmem:[%s3 + $0x384] sm:$0xf]
    %v2470 = vld [vmem:[%s3 + $0x388] sm:$0xf]
    %v2471 = vld [vmem:[%s3 + $0x38c] sm:$0xf]
    %v2472 = vld [vmem:[%s3 + $0x390] sm:$0xf]
    %v2473 = vld [vmem:[%s3 + $0x394] sm:$0xf]
    %v2474 = vld [vmem:[%s3 + $0x398] sm:$0xf]
    %v2475 = vld [vmem:[%s3 + $0x39c] sm:$0xf]
    %v2476 = vld [vmem:[%s3 + $0x3a0] sm:$0xf]
    %v2477 = vld [vmem:[%s3 + $0x3a4] sm:$0xf]
    %v2478 = vld [vmem:[%s3 + $0x3a8] sm:$0xf]
    %v2479 = vld [vmem:[%s3 + $0x3ac] sm:$0xf]
    %v2480 = vld [vmem:[%s3 + $0x3b0] sm:$0xf]
    %v2481 = vld [vmem:[%s3 + $0x3b4] sm:$0xf]
    %v2482 = vld [vmem:[%s3 + $0x3b8] sm:$0xf]
    %v2483 = vld [vmem:[%s3 + $0x3bc] sm:$0xf]
    %v2484 = vld [vmem:[%s3 + $0x3c0] sm:$0xf]
    %v2485 = vld [vmem:[%s3 + $0x3c4] sm:$0xf]
    %v2486 = vld [vmem:[%s3 + $0x3c8] sm:$0xf]
    %v2487 = vld [vmem:[%s3 + $0x3cc] sm:$0xf]
    %v2488 = vld [vmem:[%s3 + $0x3d0] sm:$0xf]
    %v2489 = vld [vmem:[%s3 + $0x3d4] sm:$0xf]
    %v2490 = vld [vmem:[%s3 + $0x3d8] sm:$0xf]
    %v2491 = vld [vmem:[%s3 + $0x3dc] sm:$0xf]
    %v2492 = vld [vmem:[%s3 + $0x3e0] sm:$0xf]
    %v2493 = vld [vmem:[%s3 + $0x3e4] sm:$0xf]
    %v2494 = vld [vmem:[%s3 + $0x3e8] sm:$0xf]
    %v2495 = vld [vmem:[%s3 + $0x3ec] sm:$0xf]
    %v2496 = vld [vmem:[%s3 + $0x3f0] sm:$0xf]
    %v2497 = vld [vmem:[%s3 + $0x3f4] sm:$0xf]
    %v2498 = vld [vmem:[%s3 + $0x3f8] sm:$0xf]
    %v2499 = vld [vmem:[%s3 + $0x3fc] sm:$0xf]
    %v2500 = vld [vmem:[%s4] sm:$0x1]
    %v2502 = vlaneseq
    %v2503 = vshrl.u32 %v2502, 7
    %v2504 = vsub.s32 0, %v2503
    %v2505 = vrot.slane %v2500, %v2504
    %v2763 = vunpack.c.l.b16 %v2244
    %v2764 = vunpack.c.l.b16 %v2245
    %v2765 = vunpack.c.l.b16 %v2246
    %v2766 = vunpack.c.l.b16 %v2247
    %v2767 = vunpack.c.l.b16 %v2248
    %v2768 = vunpack.c.l.b16 %v2249
    %v2769 = vunpack.c.l.b16 %v2250
    %v2770 = vunpack.c.l.b16 %v2251
    %v2771 = vunpack.c.l.b16 %v2252
    %v2772 = vunpack.c.l.b16 %v2253
    %v2773 = vunpack.c.l.b16 %v2254
    %v2774 = vunpack.c.l.b16 %v2255
    %v2775 = vunpack.c.l.b16 %v2256
    %v2776 = vunpack.c.l.b16 %v2257
    %v2777 = vunpack.c.l.b16 %v2258
    %v2778 = vunpack.c.l.b16 %v2259
    %v2779 = vunpack.c.l.b16 %v2260
    %v2780 = vunpack.c.l.b16 %v2261
    %v2781 = vunpack.c.l.b16 %v2262
    %v2782 = vunpack.c.l.b16 %v2263
    %v2783 = vunpack.c.l.b16 %v2264
    %v2784 = vunpack.c.l.b16 %v2265
    %v2785 = vunpack.c.l.b16 %v2266
    %v2786 = vunpack.c.l.b16 %v2267
    %v2787 = vunpack.c.l.b16 %v2268
    %v2788 = vunpack.c.l.b16 %v2269
    %v2789 = vunpack.c.l.b16 %v2270
    %v2790 = vunpack.c.l.b16 %v2271
    %v2791 = vunpack.c.l.b16 %v2272
    %v2792 = vunpack.c.l.b16 %v2273
    %v2793 = vunpack.c.l.b16 %v2274
    %v2794 = vunpack.c.l.b16 %v2275
    %v2795 = vunpack.c.l.b16 %v2276
    %v2796 = vunpack.c.l.b16 %v2277
    %v2797 = vunpack.c.l.b16 %v2278
    %v2798 = vunpack.c.l.b16 %v2279
    %v2799 = vunpack.c.l.b16 %v2280
    %v2800 = vunpack.c.l.b16 %v2281
    %v2801 = vunpack.c.l.b16 %v2282
    %v2802 = vunpack.c.l.b16 %v2283
    %v2803 = vunpack.c.l.b16 %v2284
    %v2804 = vunpack.c.l.b16 %v2285
    %v2805 = vunpack.c.l.b16 %v2286
    %v2806 = vunpack.c.l.b16 %v2287
    %v2807 = vunpack.c.l.b16 %v2288
    %v2808 = vunpack.c.l.b16 %v2289
    %v2809 = vunpack.c.l.b16 %v2290
    %v2810 = vunpack.c.l.b16 %v2291
    %v2811 = vunpack.c.l.b16 %v2292
    %v2812 = vunpack.c.l.b16 %v2293
    %v2813 = vunpack.c.l.b16 %v2294
    %v2814 = vunpack.c.l.b16 %v2295
    %v2815 = vunpack.c.l.b16 %v2296
    %v2816 = vunpack.c.l.b16 %v2297
    %v2817 = vunpack.c.l.b16 %v2298
    %v2818 = vunpack.c.l.b16 %v2299
    %v2819 = vunpack.c.l.b16 %v2300
    %v2820 = vunpack.c.l.b16 %v2301
    %v2821 = vunpack.c.l.b16 %v2302
    %v2822 = vunpack.c.l.b16 %v2303
    %v2823 = vunpack.c.l.b16 %v2304
    %v2824 = vunpack.c.l.b16 %v2305
    %v2825 = vunpack.c.l.b16 %v2306
    %v2826 = vunpack.c.l.b16 %v2307
    %v2827 = vunpack.c.l.b16 %v2308
    %v2828 = vunpack.c.l.b16 %v2309
    %v2829 = vunpack.c.l.b16 %v2310
    %v2830 = vunpack.c.l.b16 %v2311
    %v2831 = vunpack.c.l.b16 %v2312
    %v2832 = vunpack.c.l.b16 %v2313
    %v2833 = vunpack.c.l.b16 %v2314
    %v2834 = vunpack.c.l.b16 %v2315
    %v2835 = vunpack.c.l.b16 %v2316
    %v2836 = vunpack.c.l.b16 %v2317
    %v2837 = vunpack.c.l.b16 %v2318
    %v2838 = vunpack.c.l.b16 %v2319
    %v2839 = vunpack.c.l.b16 %v2320
    %v2840 = vunpack.c.l.b16 %v2321
    %v2841 = vunpack.c.l.b16 %v2322
    %v2842 = vunpack.c.l.b16 %v2323
    %v2843 = vunpack.c.l.b16 %v2324
    %v2844 = vunpack.c.l.b16 %v2325
    %v2845 = vunpack.c.l.b16 %v2326
    %v2846 = vunpack.c.l.b16 %v2327
    %v2847 = vunpack.c.l.b16 %v2328
    %v2848 = vunpack.c.l.b16 %v2329
    %v2849 = vunpack.c.l.b16 %v2330
    %v2850 = vunpack.c.l.b16 %v2331
    %v2851 = vunpack.c.l.b16 %v2332
    %v2852 = vunpack.c.l.b16 %v2333
    %v2853 = vunpack.c.l.b16 %v2334
    %v2854 = vunpack.c.l.b16 %v2335
    %v2855 = vunpack.c.l.b16 %v2336
    %v2856 = vunpack.c.l.b16 %v2337
    %v2857 = vunpack.c.l.b16 %v2338
    %v2858 = vunpack.c.l.b16 %v2339
    %v2859 = vunpack.c.l.b16 %v2340
    %v2860 = vunpack.c.l.b16 %v2341
    %v2861 = vunpack.c.l.b16 %v2342
    %v2862 = vunpack.c.l.b16 %v2343
    %v2863 = vunpack.c.l.b16 %v2344
    %v2864 = vunpack.c.l.b16 %v2345
    %v2865 = vunpack.c.l.b16 %v2346
    %v2866 = vunpack.c.l.b16 %v2347
    %v2867 = vunpack.c.l.b16 %v2348
    %v2868 = vunpack.c.l.b16 %v2349
    %v2869 = vunpack.c.l.b16 %v2350
    %v2870 = vunpack.c.l.b16 %v2351
    %v2871 = vunpack.c.l.b16 %v2352
    %v2872 = vunpack.c.l.b16 %v2353
    %v2873 = vunpack.c.l.b16 %v2354
    %v2874 = vunpack.c.l.b16 %v2355
    %v2875 = vunpack.c.l.b16 %v2356
    %v2876 = vunpack.c.l.b16 %v2357
    %v2877 = vunpack.c.l.b16 %v2358
    %v2878 = vunpack.c.l.b16 %v2359
    %v2879 = vunpack.c.l.b16 %v2360
    %v2880 = vunpack.c.l.b16 %v2361
    %v2881 = vunpack.c.l.b16 %v2362
    %v2882 = vunpack.c.l.b16 %v2363
    %v2883 = vunpack.c.l.b16 %v2364
    %v2884 = vunpack.c.l.b16 %v2365
    %v2885 = vunpack.c.l.b16 %v2366
    %v2886 = vunpack.c.l.b16 %v2367
    %v2887 = vunpack.c.l.b16 %v2368
    %v2888 = vunpack.c.l.b16 %v2369
    %v2889 = vunpack.c.l.b16 %v2370
    %v2890 = vunpack.c.l.b16 %v2371
    %v2891 = vunpack.c.l.b16 %v2372
    %v2892 = vunpack.c.l.b16 %v2373
    %v2893 = vunpack.c.l.b16 %v2374
    %v2894 = vunpack.c.l.b16 %v2375
    %v2895 = vunpack.c.l.b16 %v2376
    %v2896 = vunpack.c.l.b16 %v2377
    %v2897 = vunpack.c.l.b16 %v2378
    %v2898 = vunpack.c.l.b16 %v2379
    %v2899 = vunpack.c.l.b16 %v2380
    %v2900 = vunpack.c.l.b16 %v2381
    %v2901 = vunpack.c.l.b16 %v2382
    %v2902 = vunpack.c.l.b16 %v2383
    %v2903 = vunpack.c.l.b16 %v2384
    %v2904 = vunpack.c.l.b16 %v2385
    %v2905 = vunpack.c.l.b16 %v2386
    %v2906 = vunpack.c.l.b16 %v2387
    %v2907 = vunpack.c.l.b16 %v2388
    %v2908 = vunpack.c.l.b16 %v2389
    %v2909 = vunpack.c.l.b16 %v2390
    %v2910 = vunpack.c.l.b16 %v2391
    %v2911 = vunpack.c.l.b16 %v2392
    %v2912 = vunpack.c.l.b16 %v2393
    %v2913 = vunpack.c.l.b16 %v2394
    %v2914 = vunpack.c.l.b16 %v2395
    %v2915 = vunpack.c.l.b16 %v2396
    %v2916 = vunpack.c.l.b16 %v2397
    %v2917 = vunpack.c.l.b16 %v2398
    %v2918 = vunpack.c.l.b16 %v2399
    %v2919 = vunpack.c.l.b16 %v2400
    %v2920 = vunpack.c.l.b16 %v2401
    %v2921 = vunpack.c.l.b16 %v2402
    %v2922 = vunpack.c.l.b16 %v2403
    %v2923 = vunpack.c.l.b16 %v2404
    %v2924 = vunpack.c.l.b16 %v2405
    %v2925 = vunpack.c.l.b16 %v2406
    %v2926 = vunpack.c.l.b16 %v2407
    %v2927 = vunpack.c.l.b16 %v2408
    %v2928 = vunpack.c.l.b16 %v2409
    %v2929 = vunpack.c.l.b16 %v2410
    %v2930 = vunpack.c.l.b16 %v2411
    %v2931 = vunpack.c.l.b16 %v2412
    %v2932 = vunpack.c.l.b16 %v2413
    %v2933 = vunpack.c.l.b16 %v2414
    %v2934 = vunpack.c.l.b16 %v2415
    %v2935 = vunpack.c.l.b16 %v2416
    %v2936 = vunpack.c.l.b16 %v2417
    %v2937 = vunpack.c.l.b16 %v2418
    %v2938 = vunpack.c.l.b16 %v2419
    %v2939 = vunpack.c.l.b16 %v2420
    %v2940 = vunpack.c.l.b16 %v2421
    %v2941 = vunpack.c.l.b16 %v2422
    %v2942 = vunpack.c.l.b16 %v2423
    %v2943 = vunpack.c.l.b16 %v2424
    %v2944 = vunpack.c.l.b16 %v2425
    %v2945 = vunpack.c.l.b16 %v2426
    %v2946 = vunpack.c.l.b16 %v2427
    %v2947 = vunpack.c.l.b16 %v2428
    %v2948 = vunpack.c.l.b16 %v2429
    %v2949 = vunpack.c.l.b16 %v2430
    %v2950 = vunpack.c.l.b16 %v2431
    %v2951 = vunpack.c.l.b16 %v2432
    %v2952 = vunpack.c.l.b16 %v2433
    %v2953 = vunpack.c.l.b16 %v2434
    %v2954 = vunpack.c.l.b16 %v2435
    %v2955 = vunpack.c.l.b16 %v2436
    %v2956 = vunpack.c.l.b16 %v2437
    %v2957 = vunpack.c.l.b16 %v2438
    %v2958 = vunpack.c.l.b16 %v2439
    %v2959 = vunpack.c.l.b16 %v2440
    %v2960 = vunpack.c.l.b16 %v2441
    %v2961 = vunpack.c.l.b16 %v2442
    %v2962 = vunpack.c.l.b16 %v2443
    %v2963 = vunpack.c.l.b16 %v2444
    %v2964 = vunpack.c.l.b16 %v2445
    %v2965 = vunpack.c.l.b16 %v2446
    %v2966 = vunpack.c.l.b16 %v2447
    %v2967 = vunpack.c.l.b16 %v2448
    %v2968 = vunpack.c.l.b16 %v2449
    %v2969 = vunpack.c.l.b16 %v2450
    %v2970 = vunpack.c.l.b16 %v2451
    %v2971 = vunpack.c.l.b16 %v2452
    %v2972 = vunpack.c.l.b16 %v2453
    %v2973 = vunpack.c.l.b16 %v2454
    %v2974 = vunpack.c.l.b16 %v2455
    %v2975 = vunpack.c.l.b16 %v2456
    %v2976 = vunpack.c.l.b16 %v2457
    %v2977 = vunpack.c.l.b16 %v2458
    %v2978 = vunpack.c.l.b16 %v2459
    %v2979 = vunpack.c.l.b16 %v2460
    %v2980 = vunpack.c.l.b16 %v2461
    %v2981 = vunpack.c.l.b16 %v2462
    %v2982 = vunpack.c.l.b16 %v2463
    %v2983 = vunpack.c.l.b16 %v2464
    %v2984 = vunpack.c.l.b16 %v2465
    %v2985 = vunpack.c.l.b16 %v2466
    %v2986 = vunpack.c.l.b16 %v2467
    %v2987 = vunpack.c.l.b16 %v2468
    %v2988 = vunpack.c.l.b16 %v2469
    %v2989 = vunpack.c.l.b16 %v2470
    %v2990 = vunpack.c.l.b16 %v2471
    %v2991 = vunpack.c.l.b16 %v2472
    %v2992 = vunpack.c.l.b16 %v2473
    %v2993 = vunpack.c.l.b16 %v2474
    %v2994 = vunpack.c.l.b16 %v2475
    %v2995 = vunpack.c.l.b16 %v2476
    %v2996 = vunpack.c.l.b16 %v2477
    %v2997 = vunpack.c.l.b16 %v2478
    %v2998 = vunpack.c.l.b16 %v2479
    %v2999 = vunpack.c.l.b16 %v2480
    %v3000 = vunpack.c.l.b16 %v2481
    %v3001 = vunpack.c.l.b16 %v2482
    %v3002 = vunpack.c.l.b16 %v2483
    %v3003 = vunpack.c.l.b16 %v2484
    %v3004 = vunpack.c.l.b16 %v2485
    %v3005 = vunpack.c.l.b16 %v2486
    %v3006 = vunpack.c.l.b16 %v2487
    %v3007 = vunpack.c.l.b16 %v2488
    %v3008 = vunpack.c.l.b16 %v2489
    %v3009 = vunpack.c.l.b16 %v2490
    %v3010 = vunpack.c.l.b16 %v2491
    %v3011 = vunpack.c.l.b16 %v2492
    %v3012 = vunpack.c.l.b16 %v2493
    %v3013 = vunpack.c.l.b16 %v2494
    %v3014 = vunpack.c.l.b16 %v2495
    %v3015 = vunpack.c.l.b16 %v2496
    %v3016 = vunpack.c.l.b16 %v2497
    %v3017 = vunpack.c.l.b16 %v2498
    %v3018 = vunpack.c.l.b16 %v2499
    %v3019 = vpack.c.b16 %v2764, %v2763
    %v3020 = vpack.c.b16 %v2766, %v2765
    %v3021 = vpack.c.b16 %v2768, %v2767
    %v3022 = vpack.c.b16 %v2770, %v2769
    %v3023 = vpack.c.b16 %v2772, %v2771
    %v3024 = vpack.c.b16 %v2774, %v2773
    %v3025 = vpack.c.b16 %v2776, %v2775
    %v3026 = vpack.c.b16 %v2778, %v2777
    %v3027 = vpack.c.b16 %v2780, %v2779
    %v3028 = vpack.c.b16 %v2782, %v2781
    %v3029 = vpack.c.b16 %v2784, %v2783
    %v3030 = vpack.c.b16 %v2786, %v2785
    %v3031 = vpack.c.b16 %v2788, %v2787
    %v3032 = vpack.c.b16 %v2790, %v2789
    %v3033 = vpack.c.b16 %v2792, %v2791
    %v3034 = vpack.c.b16 %v2794, %v2793
    %v3035 = vpack.c.b16 %v2796, %v2795
    %v3036 = vpack.c.b16 %v2798, %v2797
    %v3037 = vpack.c.b16 %v2800, %v2799
    %v3038 = vpack.c.b16 %v2802, %v2801
    %v3039 = vpack.c.b16 %v2804, %v2803
    %v3040 = vpack.c.b16 %v2806, %v2805
    %v3041 = vpack.c.b16 %v2808, %v2807
    %v3042 = vpack.c.b16 %v2810, %v2809
    %v3043 = vpack.c.b16 %v2812, %v2811
    %v3044 = vpack.c.b16 %v2814, %v2813
    %v3045 = vpack.c.b16 %v2816, %v2815
    %v3046 = vpack.c.b16 %v2818, %v2817
    %v3047 = vpack.c.b16 %v2820, %v2819
    %v3048 = vpack.c.b16 %v2822, %v2821
    %v3049 = vpack.c.b16 %v2824, %v2823
    %v3050 = vpack.c.b16 %v2826, %v2825
    %v3051 = vpack.c.b16 %v2828, %v2827
    %v3052 = vpack.c.b16 %v2830, %v2829
    %v3053 = vpack.c.b16 %v2832, %v2831
    %v3054 = vpack.c.b16 %v2834, %v2833
    %v3055 = vpack.c.b16 %v2836, %v2835
    %v3056 = vpack.c.b16 %v2838, %v2837
    %v3057 = vpack.c.b16 %v2840, %v2839
    %v3058 = vpack.c.b16 %v2842, %v2841
    %v3059 = vpack.c.b16 %v2844, %v2843
    %v3060 = vpack.c.b16 %v2846, %v2845
    %v3061 = vpack.c.b16 %v2848, %v2847
    %v3062 = vpack.c.b16 %v2850, %v2849
    %v3063 = vpack.c.b16 %v2852, %v2851
    %v3064 = vpack.c.b16 %v2854, %v2853
    %v3065 = vpack.c.b16 %v2856, %v2855
    %v3066 = vpack.c.b16 %v2858, %v2857
    %v3067 = vpack.c.b16 %v2860, %v2859
    %v3068 = vpack.c.b16 %v2862, %v2861
    %v3069 = vpack.c.b16 %v2864, %v2863
    %v3070 = vpack.c.b16 %v2866, %v2865
    %v3071 = vpack.c.b16 %v2868, %v2867
    %v3072 = vpack.c.b16 %v2870, %v2869
    %v3073 = vpack.c.b16 %v2872, %v2871
    %v3074 = vpack.c.b16 %v2874, %v2873
    %v3075 = vpack.c.b16 %v2876, %v2875
    %v3076 = vpack.c.b16 %v2878, %v2877
    %v3077 = vpack.c.b16 %v2880, %v2879
    %v3078 = vpack.c.b16 %v2882, %v2881
    %v3079 = vpack.c.b16 %v2884, %v2883
    %v3080 = vpack.c.b16 %v2886, %v2885
    %v3081 = vpack.c.b16 %v2888, %v2887
    %v3082 = vpack.c.b16 %v2890, %v2889
    %v3083 = vpack.c.b16 %v2892, %v2891
    %v3084 = vpack.c.b16 %v2894, %v2893
    %v3085 = vpack.c.b16 %v2896, %v2895
    %v3086 = vpack.c.b16 %v2898, %v2897
    %v3087 = vpack.c.b16 %v2900, %v2899
    %v3088 = vpack.c.b16 %v2902, %v2901
    %v3089 = vpack.c.b16 %v2904, %v2903
    %v3090 = vpack.c.b16 %v2906, %v2905
    %v3091 = vpack.c.b16 %v2908, %v2907
    %v3092 = vpack.c.b16 %v2910, %v2909
    %v3093 = vpack.c.b16 %v2912, %v2911
    %v3094 = vpack.c.b16 %v2914, %v2913
    %v3095 = vpack.c.b16 %v2916, %v2915
    %v3096 = vpack.c.b16 %v2918, %v2917
    %v3097 = vpack.c.b16 %v2920, %v2919
    %v3098 = vpack.c.b16 %v2922, %v2921
    %v3099 = vpack.c.b16 %v2924, %v2923
    %v3100 = vpack.c.b16 %v2926, %v2925
    %v3101 = vpack.c.b16 %v2928, %v2927
    %v3102 = vpack.c.b16 %v2930, %v2929
    %v3103 = vpack.c.b16 %v2932, %v2931
    %v3104 = vpack.c.b16 %v2934, %v2933
    %v3105 = vpack.c.b16 %v2936, %v2935
    %v3106 = vpack.c.b16 %v2938, %v2937
    %v3107 = vpack.c.b16 %v2940, %v2939
    %v3108 = vpack.c.b16 %v2942, %v2941
    %v3109 = vpack.c.b16 %v2944, %v2943
    %v3110 = vpack.c.b16 %v2946, %v2945
    %v3111 = vpack.c.b16 %v2948, %v2947
    %v3112 = vpack.c.b16 %v2950, %v2949
    %v3113 = vpack.c.b16 %v2952, %v2951
    %v3114 = vpack.c.b16 %v2954, %v2953
    %v3115 = vpack.c.b16 %v2956, %v2955
    %v3116 = vpack.c.b16 %v2958, %v2957
    %v3117 = vpack.c.b16 %v2960, %v2959
    %v3118 = vpack.c.b16 %v2962, %v2961
    %v3119 = vpack.c.b16 %v2964, %v2963
    %v3120 = vpack.c.b16 %v2966, %v2965
    %v3121 = vpack.c.b16 %v2968, %v2967
    %v3122 = vpack.c.b16 %v2970, %v2969
    %v3123 = vpack.c.b16 %v2972, %v2971
    %v3124 = vpack.c.b16 %v2974, %v2973
    %v3125 = vpack.c.b16 %v2976, %v2975
    %v3126 = vpack.c.b16 %v2978, %v2977
    %v3127 = vpack.c.b16 %v2980, %v2979
    %v3128 = vpack.c.b16 %v2982, %v2981
    %v3129 = vpack.c.b16 %v2984, %v2983
    %v3130 = vpack.c.b16 %v2986, %v2985
    %v3131 = vpack.c.b16 %v2988, %v2987
    %v3132 = vpack.c.b16 %v2990, %v2989
    %v3133 = vpack.c.b16 %v2992, %v2991
    %v3134 = vpack.c.b16 %v2994, %v2993
    %v3135 = vpack.c.b16 %v2996, %v2995
    %v3136 = vpack.c.b16 %v2998, %v2997
    %v3137 = vpack.c.b16 %v3000, %v2999
    %v3138 = vpack.c.b16 %v3002, %v3001
    %v3139 = vpack.c.b16 %v3004, %v3003
    %v3140 = vpack.c.b16 %v3006, %v3005
    %v3141 = vpack.c.b16 %v3008, %v3007
    %v3142 = vpack.c.b16 %v3010, %v3009
    %v3143 = vpack.c.b16 %v3012, %v3011
    %v3144 = vpack.c.b16 %v3014, %v3013
    %v3145 = vpack.c.b16 %v3016, %v3015
    %v3146 = vpack.c.b16 %v3018, %v3017
    %3275 = vmatprep.subr.bf16.mxu0 0
    %3276 = vmatpush1.bf16.msra.mxu0 %v3026
    %3277 = vmatprep.subr.bf16.mxu0 0
    %3278 = vmatpush1.bf16.msra.mxu0 %v3025
    %3279 = vmatprep.subr.bf16.mxu0 0
    %3280 = vmatpush1.bf16.msra.mxu0 %v3024
    %3281 = vmatprep.subr.bf16.mxu0 0
    %3282 = vmatpush1.bf16.msra.mxu0 %v3023
    %3283 = vmatprep.subr.bf16.mxu0 0
    %3284 = vmatpush1.bf16.msra.mxu0 %v3022
    %3285 = vmatprep.subr.bf16.mxu0 0
    %3286 = vmatpush1.bf16.msra.mxu0 %v3021
    %3287 = vmatprep.subr.bf16.mxu0 0
    %3288 = vmatpush1.bf16.msra.mxu0 %v3020
    %3289 = vmatprep.subr.bf16.mxu0 0
    %3290 = vmatpush1.bf16.msra.mxu0 %v3019
    %3291 = vmatprep.subr.bf16.mxu0 0
    %3292 = vmatpush2.bf16.msra.mxu0 %v3034
    %3293 = vmatprep.subr.bf16.mxu0 0
    %3294 = vmatpush2.bf16.msra.mxu0 %v3033
    %3295 = vmatprep.subr.bf16.mxu0 0
    %3296 = vmatpush2.bf16.msra.mxu0 %v3032
    %3297 = vmatprep.subr.bf16.mxu0 0
    %3298 = vmatpush2.bf16.msra.mxu0 %v3031
    %3299 = vmatprep.subr.bf16.mxu0 0
    %3300 = vmatpush2.bf16.msra.mxu0 %v3030
    %3301 = vmatprep.subr.bf16.mxu0 0
    %3302 = vmatpush2.bf16.msra.mxu0 %v3029
    %3303 = vmatprep.subr.bf16.mxu0 0
    %3304 = vmatpush2.bf16.msra.mxu0 %v3028
    %3305 = vmatprep.subr.bf16.mxu0 0
    %3306 = vmatpush2.bf16.msra.mxu0 %v3027
    %3307 = vmatprep.mubr.bf16.mxu0 %v2229
    %3308 = vmatmul.mubr.bf16.gmra.mxu0 %v2228
    %v3309 = vpop.f32.mrf.mxu0
    %v3310 = vadd.f32 %v2505, %v3309
    %v3311 = vpop.f32.mrf.mxu0
    %v3312 = vpop.f32.mrf.mxu0
    %v3313 = vadd.f32 %v2505, %v3312
    %v3314 = vpop.f32.mrf.mxu0
    %3315 = vdwg.mxu0
    %3316 = vmatprep.subr.bf16.mxu0 0
    %3317 = vmatpush1.bf16.msra.mxu0 %v3042
    %3318 = vmatprep.subr.bf16.mxu0 0
    %3319 = vmatpush1.bf16.msra.mxu0 %v3041
    %3320 = vmatprep.subr.bf16.mxu0 0
    %3321 = vmatpush1.bf16.msra.mxu0 %v3040
    %3322 = vmatprep.subr.bf16.mxu0 0
    %3323 = vmatpush1.bf16.msra.mxu0 %v3039
    %3324 = vmatprep.subr.bf16.mxu0 0
    %3325 = vmatpush1.bf16.msra.mxu0 %v3038
    %3326 = vmatprep.subr.bf16.mxu0 0
    %3327 = vmatpush1.bf16.msra.mxu0 %v3037
    %3328 = vmatprep.subr.bf16.mxu0 0
    %3329 = vmatpush1.bf16.msra.mxu0 %v3036
    %3330 = vmatprep.subr.bf16.mxu0 0
    %3331 = vmatpush1.bf16.msra.mxu0 %v3035
    %3332 = vmatprep.subr.bf16.mxu0 0
    %3333 = vmatpush2.bf16.msra.mxu0 %v3050
    %3334 = vmatprep.subr.bf16.mxu0 0
    %3335 = vmatpush2.bf16.msra.mxu0 %v3049
    %3336 = vmatprep.subr.bf16.mxu0 0
    %3337 = vmatpush2.bf16.msra.mxu0 %v3048
    %3338 = vmatprep.subr.bf16.mxu0 0
    %3339 = vmatpush2.bf16.msra.mxu0 %v3047
    %3340 = vmatprep.subr.bf16.mxu0 0
    %3341 = vmatpush2.bf16.msra.mxu0 %v3046
    %3342 = vmatprep.subr.bf16.mxu0 0
    %3343 = vmatpush2.bf16.msra.mxu0 %v3045
    %3344 = vmatprep.subr.bf16.mxu0 0
    %3345 = vmatpush2.bf16.msra.mxu0 %v3044
    %3346 = vmatprep.subr.bf16.mxu0 0
    %3347 = vmatpush2.bf16.msra.mxu0 %v3043
    %3348 = vmatprep.mubr.bf16.mxu0 %v2231
    %3349 = vmatmul.mubr.bf16.gmra.mxu0 %v2230
    %v3350 = vpop.f32.mrf.mxu0
    %v3351 = vadd.f32 %v3310, %v3350
    %v3352 = vpop.f32.mrf.mxu0
    %v3353 = vpop.f32.mrf.mxu0
    %v3354 = vadd.f32 %v3313, %v3353
    %v3355 = vpop.f32.mrf.mxu0
    %3356 = vdwg.mxu0
    %3357 = vmatprep.subr.bf16.mxu0 0
    %3358 = vmatpush1.bf16.msra.mxu0 %v3058
    %3359 = vmatprep.subr.bf16.mxu0 0
    %3360 = vmatpush1.bf16.msra.mxu0 %v3057
    %3361 = vmatprep.subr.bf16.mxu0 0
    %3362 = vmatpush1.bf16.msra.mxu0 %v3056
    %3363 = vmatprep.subr.bf16.mxu0 0
    %3364 = vmatpush1.bf16.msra.mxu0 %v3055
    %3365 = vmatprep.subr.bf16.mxu0 0
    %3366 = vmatpush1.bf16.msra.mxu0 %v3054
    %3367 = vmatprep.subr.bf16.mxu0 0
    %3368 = vmatpush1.bf16.msra.mxu0 %v3053
    %3369 = vmatprep.subr.bf16.mxu0 0
    %3370 = vmatpush1.bf16.msra.mxu0 %v3052
    %3371 = vmatprep.subr.bf16.mxu0 0
    %3372 = vmatpush1.bf16.msra.mxu0 %v3051
    %3373 = vmatprep.subr.bf16.mxu0 0
    %3374 = vmatpush2.bf16.msra.mxu0 %v3066
    %3375 = vmatprep.subr.bf16.mxu0 0
    %3376 = vmatpush2.bf16.msra.mxu0 %v3065
    %3377 = vmatprep.subr.bf16.mxu0 0
    %3378 = vmatpush2.bf16.msra.mxu0 %v3064
    %3379 = vmatprep.subr.bf16.mxu0 0
    %3380 = vmatpush2.bf16.msra.mxu0 %v3063
    %3381 = vmatprep.subr.bf16.mxu0 0
    %3382 = vmatpush2.bf16.msra.mxu0 %v3062
    %3383 = vmatprep.subr.bf16.mxu0 0
    %3384 = vmatpush2.bf16.msra.mxu0 %v3061
    %3385 = vmatprep.subr.bf16.mxu0 0
    %3386 = vmatpush2.bf16.msra.mxu0 %v3060
    %3387 = vmatprep.subr.bf16.mxu0 0
    %3388 = vmatpush2.bf16.msra.mxu0 %v3059
    %3389 = vmatprep.mubr.bf16.mxu0 %v2233
    %3390 = vmatmul.mubr.bf16.gmra.mxu0 %v2232
    %v3391 = vpop.f32.mrf.mxu0
    %v3392 = vadd.f32 %v3351, %v3391
    %v3393 = vpop.f32.mrf.mxu0
    %v3394 = vpop.f32.mrf.mxu0
    %v3395 = vadd.f32 %v3354, %v3394
    %v3396 = vpop.f32.mrf.mxu0
    %3397 = vdwg.mxu0
    %3398 = vmatprep.subr.bf16.mxu0 0
    %3399 = vmatpush1.bf16.msra.mxu0 %v3074
    %3400 = vmatprep.subr.bf16.mxu0 0
    %3401 = vmatpush1.bf16.msra.mxu0 %v3073
    %3402 = vmatprep.subr.bf16.mxu0 0
    %3403 = vmatpush1.bf16.msra.mxu0 %v3072
    %3404 = vmatprep.subr.bf16.mxu0 0
    %3405 = vmatpush1.bf16.msra.mxu0 %v3071
    %3406 = vmatprep.subr.bf16.mxu0 0
    %3407 = vmatpush1.bf16.msra.mxu0 %v3070
    %3408 = vmatprep.subr.bf16.mxu0 0
    %3409 = vmatpush1.bf16.msra.mxu0 %v3069
    %3410 = vmatprep.subr.bf16.mxu0 0
    %3411 = vmatpush1.bf16.msra.mxu0 %v3068
    %3412 = vmatprep.subr.bf16.mxu0 0
    %3413 = vmatpush1.bf16.msra.mxu0 %v3067
    %3414 = vmatprep.subr.bf16.mxu0 0
    %3415 = vmatpush2.bf16.msra.mxu0 %v3082
    %3416 = vmatprep.subr.bf16.mxu0 0
    %3417 = vmatpush2.bf16.msra.mxu0 %v3081
    %3418 = vmatprep.subr.bf16.mxu0 0
    %3419 = vmatpush2.bf16.msra.mxu0 %v3080
    %3420 = vmatprep.subr.bf16.mxu0 0
    %3421 = vmatpush2.bf16.msra.mxu0 %v3079
    %3422 = vmatprep.subr.bf16.mxu0 0
    %3423 = vmatpush2.bf16.msra.mxu0 %v3078
    %3424 = vmatprep.subr.bf16.mxu0 0
    %3425 = vmatpush2.bf16.msra.mxu0 %v3077
    %3426 = vmatprep.subr.bf16.mxu0 0
    %3427 = vmatpush2.bf16.msra.mxu0 %v3076
    %3428 = vmatprep.subr.bf16.mxu0 0
    %3429 = vmatpush2.bf16.msra.mxu0 %v3075
    %3430 = vmatprep.mubr.bf16.mxu0 %v2235
    %3431 = vmatmul.mubr.bf16.gmra.mxu0 %v2234
    %v3432 = vpop.f32.mrf.mxu0
    %v3433 = vadd.f32 %v3392, %v3432
    %v3434 = vpop.f32.mrf.mxu0
    %v3435 = vpop.f32.mrf.mxu0
    %v3436 = vadd.f32 %v3395, %v3435
    %v3437 = vpop.f32.mrf.mxu0
    %3438 = vdwg.mxu0
    %3439 = vmatprep.subr.bf16.mxu0 0
    %3440 = vmatpush1.bf16.msra.mxu0 %v3090
    %3441 = vmatprep.subr.bf16.mxu0 0
    %3442 = vmatpush1.bf16.msra.mxu0 %v3089
    %3443 = vmatprep.subr.bf16.mxu0 0
    %3444 = vmatpush1.bf16.msra.mxu0 %v3088
    %3445 = vmatprep.subr.bf16.mxu0 0
    %3446 = vmatpush1.bf16.msra.mxu0 %v3087
    %3447 = vmatprep.subr.bf16.mxu0 0
    %3448 = vmatpush1.bf16.msra.mxu0 %v3086
    %3449 = vmatprep.subr.bf16.mxu0 0
    %3450 = vmatpush1.bf16.msra.mxu0 %v3085
    %3451 = vmatprep.subr.bf16.mxu0 0
    %3452 = vmatpush1.bf16.msra.mxu0 %v3084
    %3453 = vmatprep.subr.bf16.mxu0 0
    %3454 = vmatpush1.bf16.msra.mxu0 %v3083
    %3455 = vmatprep.subr.bf16.mxu0 0
    %3456 = vmatpush2.bf16.msra.mxu0 %v3098
    %3457 = vmatprep.subr.bf16.mxu0 0
    %3458 = vmatpush2.bf16.msra.mxu0 %v3097
    %3459 = vmatprep.subr.bf16.mxu0 0
    %3460 = vmatpush2.bf16.msra.mxu0 %v3096
    %3461 = vmatprep.subr.bf16.mxu0 0
    %3462 = vmatpush2.bf16.msra.mxu0 %v3095
    %3463 = vmatprep.subr.bf16.mxu0 0
    %3464 = vmatpush2.bf16.msra.mxu0 %v3094
    %3465 = vmatprep.subr.bf16.mxu0 0
    %3466 = vmatpush2.bf16.msra.mxu0 %v3093
    %3467 = vmatprep.subr.bf16.mxu0 0
    %3468 = vmatpush2.bf16.msra.mxu0 %v3092
    %3469 = vmatprep.subr.bf16.mxu0 0
    %3470 = vmatpush2.bf16.msra.mxu0 %v3091
    %3471 = vmatprep.mubr.bf16.mxu0 %v2237
    %3472 = vmatmul.mubr.bf16.gmra.mxu0 %v2236
    %v3473 = vpop.f32.mrf.mxu0
    %v3474 = vadd.f32 %v3433, %v3473
    %v3475 = vpop.f32.mrf.mxu0
    %v3476 = vpop.f32.mrf.mxu0
    %v3477 = vadd.f32 %v3436, %v3476
    %v3478 = vpop.f32.mrf.mxu0
    %3479 = vdwg.mxu0
    %3480 = vmatprep.subr.bf16.mxu0 0
    %3481 = vmatpush1.bf16.msra.mxu0 %v3106
    %3482 = vmatprep.subr.bf16.mxu0 0
    %3483 = vmatpush1.bf16.msra.mxu0 %v3105
    %3484 = vmatprep.subr.bf16.mxu0 0
    %3485 = vmatpush1.bf16.msra.mxu0 %v3104
    %3486 = vmatprep.subr.bf16.mxu0 0
    %3487 = vmatpush1.bf16.msra.mxu0 %v3103
    %3488 = vmatprep.subr.bf16.mxu0 0
    %3489 = vmatpush1.bf16.msra.mxu0 %v3102
    %3490 = vmatprep.subr.bf16.mxu0 0
    %3491 = vmatpush1.bf16.msra.mxu0 %v3101
    %3492 = vmatprep.subr.bf16.mxu0 0
    %3493 = vmatpush1.bf16.msra.mxu0 %v3100
    %3494 = vmatprep.subr.bf16.mxu0 0
    %3495 = vmatpush1.bf16.msra.mxu0 %v3099
    %3496 = vmatprep.subr.bf16.mxu0 0
    %3497 = vmatpush2.bf16.msra.mxu0 %v3114
    %3498 = vmatprep.subr.bf16.mxu0 0
    %3499 = vmatpush2.bf16.msra.mxu0 %v3113
    %3500 = vmatprep.subr.bf16.mxu0 0
    %3501 = vmatpush2.bf16.msra.mxu0 %v3112
    %3502 = vmatprep.subr.bf16.mxu0 0
    %3503 = vmatpush2.bf16.msra.mxu0 %v3111
    %3504 = vmatprep.subr.bf16.mxu0 0
    %3505 = vmatpush2.bf16.msra.mxu0 %v3110
    %3506 = vmatprep.subr.bf16.mxu0 0
    %3507 = vmatpush2.bf16.msra.mxu0 %v3109
    %3508 = vmatprep.subr.bf16.mxu0 0
    %3509 = vmatpush2.bf16.msra.mxu0 %v3108
    %3510 = vmatprep.subr.bf16.mxu0 0
    %3511 = vmatpush2.bf16.msra.mxu0 %v3107
    %3512 = vmatprep.mubr.bf16.mxu0 %v2239
    %3513 = vmatmul.mubr.bf16.gmra.mxu0 %v2238
    %v3514 = vpop.f32.mrf.mxu0
    %v3515 = vadd.f32 %v3474, %v3514
    %v3516 = vpop.f32.mrf.mxu0
    %v3517 = vpop.f32.mrf.mxu0
    %v3518 = vadd.f32 %v3477, %v3517
    %v3519 = vpop.f32.mrf.mxu0
    %3520 = vdwg.mxu0
    %3521 = vmatprep.subr.bf16.mxu0 0
    %3522 = vmatpush1.bf16.msra.mxu0 %v3122
    %3523 = vmatprep.subr.bf16.mxu0 0
    %3524 = vmatpush1.bf16.msra.mxu0 %v3121
    %3525 = vmatprep.subr.bf16.mxu0 0
    %3526 = vmatpush1.bf16.msra.mxu0 %v3120
    %3527 = vmatprep.subr.bf16.mxu0 0
    %3528 = vmatpush1.bf16.msra.mxu0 %v3119
    %3529 = vmatprep.subr.bf16.mxu0 0
    %3530 = vmatpush1.bf16.msra.mxu0 %v3118
    %3531 = vmatprep.subr.bf16.mxu0 0
    %3532 = vmatpush1.bf16.msra.mxu0 %v3117
    %3533 = vmatprep.subr.bf16.mxu0 0
    %3534 = vmatpush1.bf16.msra.mxu0 %v3116
    %3535 = vmatprep.subr.bf16.mxu0 0
    %3536 = vmatpush1.bf16.msra.mxu0 %v3115
    %3537 = vmatprep.subr.bf16.mxu0 0
    %3538 = vmatpush2.bf16.msra.mxu0 %v3130
    %3539 = vmatprep.subr.bf16.mxu0 0
    %3540 = vmatpush2.bf16.msra.mxu0 %v3129
    %3541 = vmatprep.subr.bf16.mxu0 0
    %3542 = vmatpush2.bf16.msra.mxu0 %v3128
    %3543 = vmatprep.subr.bf16.mxu0 0
    %3544 = vmatpush2.bf16.msra.mxu0 %v3127
    %3545 = vmatprep.subr.bf16.mxu0 0
    %3546 = vmatpush2.bf16.msra.mxu0 %v3126
    %3547 = vmatprep.subr.bf16.mxu0 0
    %3548 = vmatpush2.bf16.msra.mxu0 %v3125
    %3549 = vmatprep.subr.bf16.mxu0 0
    %3550 = vmatpush2.bf16.msra.mxu0 %v3124
    %3551 = vmatprep.subr.bf16.mxu0 0
    %3552 = vmatpush2.bf16.msra.mxu0 %v3123
    %3553 = vmatprep.mubr.bf16.mxu0 %v2241
    %3554 = vmatmul.mubr.bf16.gmra.mxu0 %v2240
    %v3555 = vpop.f32.mrf.mxu0
    %v3556 = vadd.f32 %v3515, %v3555
    %v3557 = vpop.f32.mrf.mxu0
    %v3558 = vpop.f32.mrf.mxu0
    %v3559 = vadd.f32 %v3518, %v3558
    %v3560 = vpop.f32.mrf.mxu0
    %3561 = vdwg.mxu0
    %3562 = vmatprep.subr.bf16.mxu0 0
    %3563 = vmatpush1.bf16.msra.mxu0 %v3138
    %3564 = vmatprep.subr.bf16.mxu0 0
    %3565 = vmatpush1.bf16.msra.mxu0 %v3137
    %3566 = vmatprep.subr.bf16.mxu0 0
    %3567 = vmatpush1.bf16.msra.mxu0 %v3136
    %3568 = vmatprep.subr.bf16.mxu0 0
    %3569 = vmatpush1.bf16.msra.mxu0 %v3135
    %3570 = vmatprep.subr.bf16.mxu0 0
    %3571 = vmatpush1.bf16.msra.mxu0 %v3134
    %3572 = vmatprep.subr.bf16.mxu0 0
    %3573 = vmatpush1.bf16.msra.mxu0 %v3133
    %3574 = vmatprep.subr.bf16.mxu0 0
    %3575 = vmatpush1.bf16.msra.mxu0 %v3132
    %3576 = vmatprep.subr.bf16.mxu0 0
    %3577 = vmatpush1.bf16.msra.mxu0 %v3131
    %3578 = vmatprep.subr.bf16.mxu0 0
    %3579 = vmatpush2.bf16.msra.mxu0 %v3146
    %3580 = vmatprep.subr.bf16.mxu0 0
    %3581 = vmatpush2.bf16.msra.mxu0 %v3145
    %3582 = vmatprep.subr.bf16.mxu0 0
    %3583 = vmatpush2.bf16.msra.mxu0 %v3144
    %3584 = vmatprep.subr.bf16.mxu0 0
    %3585 = vmatpush2.bf16.msra.mxu0 %v3143
    %3586 = vmatprep.subr.bf16.mxu0 0
    %3587 = vmatpush2.bf16.msra.mxu0 %v3142
    %3588 = vmatprep.subr.bf16.mxu0 0
    %3589 = vmatpush2.bf16.msra.mxu0 %v3141
    %3590 = vmatprep.subr.bf16.mxu0 0
    %3591 = vmatpush2.bf16.msra.mxu0 %v3140
    %3592 = vmatprep.subr.bf16.mxu0 0
    %3593 = vmatpush2.bf16.msra.mxu0 %v3139
    %3594 = vmatprep.mubr.bf16.mxu0 %v2243
    %3595 = vmatmul.mubr.bf16.gmra.mxu0 %v2242
    %v3596 = vpop.f32.mrf.mxu0
    %v3597 = vadd.f32 %v3556, %v3596
    %v3598 = vpop.f32.mrf.mxu0
    %v3599 = vpop.f32.mrf.mxu0
    %v3600 = vadd.f32 %v3559, %v3599
    %v3601 = vpop.f32.mrf.mxu0
    %3602 = vdwg.mxu0
    %3603 = vst [vmem:[%s5] sm:$0xff] %v3597
    %3604 = vst [vmem:[%s5 + $0x8] sm:$0xff] %v3600
  $region29: #{encoder_projector_dual_concat.1} parent=0 // pred_fallthru
    _
  // Predicated region
  $region30: #{encoder_projector_dual_concat.1} parent=0 // pred_check
    _
  $region31: #{encoder_projector_dual_concat.1} parent=0 // pred_check_branch
    %3606 = sbr.rel (0) target = $region33
  $region32: #{encoder_projector_dual_concat.1} parent=0 // pred_region
    _
  $region33: #{encoder_projector_dual_concat.1} parent=0 // pred_fallthru
    _
  // Predicated region
  $region34: #{encoder_projector_dual_concat.1} parent=0 // pred_check
    _
  $region35: #{encoder_projector_dual_concat.1} parent=0 // pred_check_branch
    %3608 = sbr.rel (0) target = $region37
  $region36: #{encoder_projector_dual_concat.1} parent=0 // pred_region
    _
  $region37: #{encoder_projector_dual_concat.1} parent=0 // pred_fallthru
    _

</llo_original>
